<compile_context>
chip_gen: v7x
topology: tpu7x:2x2x1
jax: 0.10.0
libtpu: 0.0.40
codegen_flags: <defaults>
</compile_context>

<pallas_src>
import functools

import jax
import jax.numpy as jnp
from jax.experimental import pallas as pl
from jax.experimental.pallas import tpu as pltpu

_EPS = 1e-5            # nn.InstanceNorm3d default eps
_NEG_SLOPE = 0.01      # nn.LeakyReLU default negative_slope
_LANE = 128
_SUBLANE = 8
_MAX_TILE_S = 2048     # S-tile width (lanes) for the two-pass path
_MAX_TILE_K = 1024     # K-tile depth for the two-pass path


# ----------------------------------------------------------------------------
# Host-side helpers
# ----------------------------------------------------------------------------
def _round_up(v, m):
    return (v + m - 1) // m * m


def _triple(v):
    if isinstance(v, (tuple, list)):
        assert len(v) == 3
        return tuple(int(t) for t in v)
    return (int(v),) * 3


def _pick_tile(extent, unit, max_tile):
    """Even-split tile: multiple of `unit`, <= max_tile, minimal pad waste."""
    e = _round_up(extent, unit)
    if e <= max_tile:
        return e
    num = -(-e // max_tile)
    return _round_up(-(-e // num), unit)


@functools.lru_cache(maxsize=None)
def _vmem_budget():
    """(vmem_limit_bytes, fused-path byte budget) sized per TPU generation."""
    try:
        phys = int(pltpu.get_tpu_info().vmem_capacity_bytes)
    except Exception:
        phys = 64 * 1024 * 1024                      # conservative (v7x)
    limit = max(32 * 1024 * 1024,
                min(phys - 16 * 1024 * 1024, 112 * 1024 * 1024))
    return limit, (limit * 3) // 4


@functools.lru_cache(maxsize=None)
def _num_tensorcores():
    try:
        d = jax.devices()[0]
        for attr in ("num_cores", "core_count"):
            v = getattr(d, attr, None)
            if v:
                return max(1, int(v))
    except Exception:
        pass
    return 1


# ----------------------------------------------------------------------------
# Pallas kernels (all lane-dense: channels on sublanes, spatial S on lanes)
# ----------------------------------------------------------------------------
def _fused_kernel(p_ref, w_ref, o_ref, *, inv_s, pad_cols, neg_slope):
    """Single-pass: matmul + InstanceNorm (shifted variance) + LeakyReLU."""
    acc = jnp.dot(w_ref[...], p_ref[...], preferred_element_type=jnp.float32)
    mean = jnp.sum(acc, axis=1, keepdims=True) * inv_s     # zero pad cols -> 0
    d = acc - mean
    # Each zero-padded S column contributes exactly mean^2 to sum(d*d).
    ss = jnp.sum(d * d, axis=1, keepdims=True) - pad_cols * (mean * mean)
    var = jnp.maximum(ss * inv_s, 0.0)
    y = d * jax.lax.rsqrt(var + _EPS)
    o_ref[...] = jnp.where(y >= 0, y, neg_slope * y)


def _fused_res_kernel(p_ref, w_ref, r_ref, o_ref, *, inv_s, pad_cols,
                      neg_slope):
    acc = jnp.dot(w_ref[...], p_ref[...], preferred_element_type=jnp.float32)
    mean = jnp.sum(acc, axis=1, keepdims=True) * inv_s
    d = acc - mean
    ss = jnp.sum(d * d, axis=1, keepdims=True) - pad_cols * (mean * mean)
    var = jnp.maximum(ss * inv_s, 0.0)
    y = d * jax.lax.rsqrt(var + _EPS)
    o_ref[...] = jnp.where(y >= 0, y, neg_slope * y) + r_ref[...]


def _matmul_stats_kernel(p_ref, w_ref, acc_out_ref, stats_ref, acc_ref):
    """Pass 1, grid (N, S-tiles, K-tiles): acc += W_kblk @ P_kblk; at the last
    K step emit the bf16 pre-norm tile plus per-channel partial sum/sumsq."""
    k = pl.program_id(2)

    @pl.when(k == 0)
    def _():
        acc_ref[...] = jnp.zeros_like(acc_ref)

    acc_ref[...] += jnp.dot(w_ref[...], p_ref[...],
                            preferred_element_type=jnp.float32)

    @pl.when(k == pl.num_programs(2) - 1)
    def _():
        acc = acc_ref[...]
        acc_out_ref[...] = acc.astype(acc_out_ref.dtype)       # bf16 to HBM
        s = jnp.sum(acc, axis=1, keepdims=True)                # pads give 0
        ss = jnp.sum(acc * acc, axis=1, keepdims=True)
        stats_ref[...] = jnp.concatenate([s, ss], axis=1)      # [Cout_pad, 2]


def _norm_act_kernel(acc_ref, mr_ref, o_ref, *, neg_slope):
    """Pass 2: normalize with precomputed (mean, rstd) + LeakyReLU."""
    acc = acc_ref[...].astype(jnp.float32)
    y = (acc - mr_ref[:, 0:1]) * mr_ref[:, 1:2]
    o_ref[...] = jnp.where(y >= 0, y, neg_slope * y)


def _norm_act_res_kernel(acc_ref, mr_ref, r_ref, o_ref, *, neg_slope):
    acc = acc_ref[...].astype(jnp.float32)
    y = (acc - mr_ref[:, 0:1]) * mr_ref[:, 1:2]
    o_ref[...] = jnp.where(y >= 0, y, neg_slope * y) + r_ref[...]


# ----------------------------------------------------------------------------
# im2col (bf16, built directly into the kernel-padded shape)
# ----------------------------------------------------------------------------
def _im2col_T(x, k, stride, padding, k_pad, s_pad):
    """x: [N, Cin, H, W, D] -> patchesT [N, k_pad, s_pad] bf16; K ordered
    (cin, kh, kw, kd) to match w.reshape(Cout, -1)."""
    N, Cin, H, W, D = x.shape
    sh, sw, sd = stride
    ph, pw, pd = padding
    Ho = (H + 2 * ph - k) // sh + 1
    Wo = (W + 2 * pw - k) // sw + 1
    Do = (D + 2 * pd - k) // sd + 1
    # Cast to bf16 BEFORE the k^3 expansion so the stack/pad copies are halved.
    xp = jnp.pad(x.astype(jnp.bfloat16),
                 ((0, 0), (0, 0), (ph, ph), (pw, pw), (pd, pd)))
    taps = []
    for kh in range(k):
        for kw in range(k):
            for kd in range(k):
                taps.append(
                    xp[:, :, kh:kh + sh * (Ho - 1) + 1:sh,
                           kw:kw + sw * (Wo - 1) + 1:sw,
                           kd:kd + sd * (Do - 1) + 1:sd])
    K = Cin * k ** 3
    S = Ho * Wo * Do
    patches = jnp.stack(taps, axis=2).reshape(N, K, S)
    return jnp.pad(patches, ((0, 0), (0, k_pad - K), (0, s_pad - S)))


# ----------------------------------------------------------------------------
# One conv stage: Conv3d (no bias) + InstanceNorm3d + LeakyReLU [+ residual]
# ----------------------------------------------------------------------------
def fused_conv3d_instnorm_act(x, w, stride, padding, residual=None,
                              neg_slope=_NEG_SLOPE, force_two_pass=False,
                              max_tile_s=_MAX_TILE_S, max_tile_k=_MAX_TILE_K):
    """
    x        : [N, Cin, H, W, D]  float32 (NCDHW)
    w        : [Cout, Cin, k, k, k]  (PyTorch Conv3d weight layout)
    residual : optional [N, Cout, Ho, Wo, Do], added AFTER norm + activation
    returns  : [N, Cout, Ho, Wo, Do]  float32
    """
    N, Cin, H, W, D = x.shape
    Cout = w.shape[0]
    k = w.shape[2]
    stride = _triple(stride)
    padding = _triple(padding)
    sh, sw, sd = stride
    ph, pw, pd = padding
    Ho = (H + 2 * ph - k) // sh + 1
    Wo = (W + 2 * pw - k) // sw + 1
    Do = (D + 2 * pd - k) // sd + 1
    S = Ho * Wo * Do
    K = Cin * k ** 3

    tile_s = _pick_tile(S, _LANE, max_tile_s)
    tile_k = _pick_tile(K, _LANE, max_tile_k)
    S_pad = _round_up(S, tile_s)
    K_pad = _round_up(K, tile_k)
    num_s = S_pad // tile_s
    num_k = K_pad // tile_k
    Cout_pad = _round_up(Cout, _SUBLANE)

    vmem_limit, fused_budget = _vmem_budget()

    patches = _im2col_T(x, k, stride, padding, K_pad, S_pad)   # bf16
    wmat = jnp.pad(w.reshape(Cout, K).astype(jnp.bfloat16),
                   ((0, Cout_pad - Cout), (0, K_pad - K)))

    res = None
    if residual is not None:
        res = residual.reshape(N, Cout, S)
        if Cout_pad != Cout or S_pad != S:
            res = jnp.pad(res, ((0, 0), (0, Cout_pad - Cout), (0, S_pad - S)))

    inv_s = 1.0 / float(S)
    pad_cols = float(S_pad - S)

    # Single-pass feasibility: double-buffered blocks + in-kernel f32 temps.
    fused_bytes = (2 * (K_pad * S_pad * 2 + Cout_pad * K_pad * 2)
                   + 2 * Cout_pad * S_pad * 4
                   + (2 * Cout_pad * S_pad * 4 if res is not None else 0)
                   + 4 * Cout_pad * S_pad * 4)
    use_fused = (not force_two_pass) and fused_bytes <= fused_budget
    if use_fused and N == 1 and num_s >= 2 and _num_tensorcores() > 1:
        use_fused = False        # keep both v7x TensorCores busy at batch 1

    if use_fused:
        # ---- single-pass: whole per-sample problem lives in VMEM ------------
        kernel = _fused_res_kernel if res is not None else _fused_kernel
        kernel = functools.partial(kernel, inv_s=inv_s, pad_cols=pad_cols,
                                   neg_slope=neg_slope)
        in_specs = [
            pl.BlockSpec((None, K_pad, S_pad), lambda n: (n, 0, 0)),
            pl.BlockSpec((Cout_pad, K_pad), lambda n: (0, 0)),
        ]
        args = [patches, wmat]
        if res is not None:
            in_specs.append(pl.BlockSpec((None, Cout_pad, S_pad),
                                         lambda n: (n, 0, 0)))
            args.append(res)
        y = pl.pallas_call(
            kernel,
            out_shape=jax.ShapeDtypeStruct((N, Cout_pad, S_pad), jnp.float32),
            grid=(N,),
            in_specs=in_specs,
            out_specs=pl.BlockSpec((None, Cout_pad, S_pad), lambda n: (n, 0, 0)),
            compiler_params=pltpu.CompilerParams(
                dimension_semantics=("parallel",),
                vmem_limit_bytes=vmem_limit),
        )(*args)
    else:
        # ---- two-pass: K-tiled matmul + partial stats, then normalize -------
        acc_bf16, part_stats = pl.pallas_call(
            _matmul_stats_kernel,
            out_shape=(
                jax.ShapeDtypeStruct((N, Cout_pad, S_pad), jnp.bfloat16),
                jax.ShapeDtypeStruct((N, num_s, Cout_pad, 2), jnp.float32)),
            grid=(N, num_s, num_k),
            in_specs=[
                pl.BlockSpec((None, tile_k, tile_s),
                             lambda n, s, kk: (n, kk, s)),
                pl.BlockSpec((Cout_pad, tile_k), lambda n, s, kk: (0, kk)),
            ],
            out_specs=(
                pl.BlockSpec((None, Cout_pad, tile_s),
                             lambda n, s, kk: (n, 0, s)),
                pl.BlockSpec((None, None, Cout_pad, 2),
                             lambda n, s, kk: (n, s, 0, 0))),
            scratch_shapes=[pltpu.VMEM((Cout_pad, tile_s), jnp.float32)],
            compiler_params=pltpu.CompilerParams(
                dimension_semantics=("parallel", "parallel", "arbitrary"),
                vmem_limit_bytes=vmem_limit),
        )(patches, wmat)

        # Tiny host-side combine -> per-channel (mean, rstd)  [N, Cout_pad, 2]
        stats = jnp.sum(part_stats, axis=1)
        mean = stats[..., 0:1] * inv_s
        var = jnp.maximum(stats[..., 1:2] * inv_s - mean * mean, 0.0)
        mr = jnp.concatenate([mean, jax.lax.rsqrt(var + _EPS)], axis=-1)

        kernel = _norm_act_res_kernel if res is not None else _norm_act_kernel
        kernel = functools.partial(kernel, neg_slope=neg_slope)
        in_specs = [
            pl.BlockSpec((None, Cout_pad, tile_s), lambda n, s: (n, 0, s)),
            pl.BlockSpec((None, Cout_pad, 2), lambda n, s: (n, 0, 0)),
        ]
        args = [acc_bf16, mr]
        if res is not None:
            in_specs.append(pl.BlockSpec((None, Cout_pad, tile_s),
                                         lambda n, s: (n, 0, s)))
            args.append(res)
        y = pl.pallas_call(
            kernel,
            out_shape=jax.ShapeDtypeStruct((N, Cout_pad, S_pad), jnp.float32),
            grid=(N, num_s),
            in_specs=in_specs,
            out_specs=pl.BlockSpec((None, Cout_pad, tile_s),
                                   lambda n, s: (n, 0, s)),
            compiler_params=pltpu.CompilerParams(
                dimension_semantics=("parallel", "parallel"),
                vmem_limit_bytes=vmem_limit),
        )(*args)

    if Cout_pad != Cout or S_pad != S:
        y = y[:, :Cout, :S]
    return y.reshape(N, Cout, Ho, Wo, Do)


# ----------------------------------------------------------------------------
# DownBlock forward (mirrors the PyTorch module)
# ----------------------------------------------------------------------------
def downblock_forward(x, params, *, stride=2, padding=0, is_res=True,
                      activation="leakyrelu"):
    """Returns (x_out, x_conv1), both NCDHW — same as DownBlock.forward."""
    neg_slope = _NEG_SLOPE if activation == "leakyrelu" else 0.0
    k = params["w1"].shape[2]
    # conv1: stride 1, padding='same' (odd kernel -> k//2), norm1, activation,
    # then residual add of the ORIGINAL input (after activation).
    x_conv1 = fused_conv3d_instnorm_act(
        x, params["w1"], stride=1, padding=k // 2,
        residual=(x if is_res else None), neg_slope=neg_slope)
    # conv2: user stride / padding, norm2, activation.
    x_out = fused_conv3d_instnorm_act(
        x_conv1, params["w2"], stride=stride, padding=padding,
        residual=None, neg_slope=neg_slope)
    # TODO(synk): dropout=None in the reference default, so nn.Dropout is never
    # constructed; treated as identity here.
    return x_out, x_conv1


# ----------------------------------------------------------------------------
# Deterministic parameter init (PyTorch Conv3d fan-in uniform bounds)
# ----------------------------------------------------------------------------
def init_params(key, in_channels, out_channels, k=3):
    k1, k2 = jax.random.split(key)

    def conv_w(kk, cin, cout):
        bound = 1.0 / float(cin * k ** 3) ** 0.5
        return jax.random.uniform(kk, (cout, cin, k, k, k), jnp.float32,
                                  -bound, bound)

    # Conv biases omitted on purpose: immediately followed by
    # InstanceNorm3d(affine=False), which cancels any per-channel bias exactly.
    return {"w1": conv_w(k1, in_channels, in_channels),
            "w2": conv_w(k2, in_channels, out_channels)}


# ----------------------------------------------------------------------------
# Pure-JAX reference (same bf16 matmul-operand precision as the kernels)
# ----------------------------------------------------------------------------
def _reference_stage(x_in, w, stride, padding, neg_slope):
    xl = x_in.astype(jnp.bfloat16).astype(jnp.float32)
    wl = w.astype(jnp.bfloat16).astype(jnp.float32)
    y = jax.lax.conv_general_dilated(
        xl, wl, window_strides=stride, padding=[(p, p) for p in padding],
        dimension_numbers=("NCDHW", "OIDHW", "NCDHW"),
        precision=jax.lax.Precision.HIGHEST)
    mean = jnp.mean(y, axis=(2, 3, 4), keepdims=True)
    var = jnp.mean((y - mean) ** 2, axis=(2, 3, 4), keepdims=True)
    y = (y - mean) * jax.lax.rsqrt(var + _EPS)
    return jnp.where(y >= 0, y, neg_slope * y)


def _reference_downblock(x, params, *, stride, padding, is_res, neg_slope):
    k = params["w1"].shape[2]
    x1 = _reference_stage(x, params["w1"], (1, 1, 1), (k // 2,) * 3, neg_slope)
    if is_res:
        x1 = x1 + x
    x2 = _reference_stage(x1, params["w2"], _triple(stride), _triple(padding),
                          neg_slope)
    return x2, x1


if __name__ == "__main__":
    key = jax.random.PRNGKey(0)
    kx, kp = jax.random.split(key)

    # DownBlock(in_channels=8, out_channels=16, kernel_size=3, stride=2,
    #           padding=0, is_res=True, activation='leakyrelu')
    # on a small NCDHW volume: batch=2, channels=8, spatial 16x16x8.
    N, Cin, Cout = 2, 8, 16
    H, W, D = 16, 16, 8
    stride, padding = 2, 0

    x = jax.random.normal(kx, (N, Cin, H, W, D), dtype=jnp.float32)
    params = init_params(kp, Cin, Cout, k=3)

    fwd = jax.jit(functools.partial(downblock_forward, stride=stride,
                                    padding=padding, is_res=True))
    x_out, x_conv1 = fwd(x, params)
    jax.block_until_ready((x_out, x_conv1))

    Ho = (H - 3) // stride + 1
    Wo = (W - 3) // stride + 1
    Do = (D - 3) // stride + 1
    assert x_conv1.shape == (N, Cin, H, W, D), x_conv1.shape
    assert x_out.shape == (N, Cout, Ho, Wo, Do), x_out.shape
    assert bool(jnp.isfinite(x_out).all()) and bool(jnp.isfinite(x_conv1).all())

    # Numerics vs a pure-JAX reference using the same bf16 matmul operands.
    r_out, r_conv1 = _reference_downblock(x, params, stride=stride,
                                          padding=padding, is_res=True,
                                          neg_slope=_NEG_SLOPE)
    err1 = float(jnp.max(jnp.abs(x_conv1 - r_conv1)))
    err2 = float(jnp.max(jnp.abs(x_out - r_out)))
    assert err1 < 3e-2 and err2 < 3e-2, (err1, err2)

    # Also exercise the two-pass S/K-tiled path (bf16 intermediate, K-tiled
    # VMEM accumulator, per-tile partial stats) on the conv1-style stage.
    y_tp = fused_conv3d_instnorm_act(
        x, params["w1"], stride=1, padding=1, residual=x,
        neg_slope=_NEG_SLOPE, force_two_pass=True,
        max_tile_s=512, max_tile_k=128)
    jax.block_until_ready(y_tp)
    ref_tp = _reference_stage(x, params["w1"], (1, 1, 1), (1, 1, 1),
                              _NEG_SLOPE) + x
    err3 = float(jnp.max(jnp.abs(y_tp - ref_tp)))
    assert bool(jnp.isfinite(y_tp).all()) and err3 < 5e-2, err3

    print("KERNEL_OK")
</pallas_src>

<mosaic_0001>
module attributes {stable_mosaic.version = 11 : i64} {
  func.func @_fused_res_kernel(%arg0: i32, %arg1: memref<1x256x2048xbf16, #tpu.memory_space<vmem>>, %arg2: memref<8x256xbf16, #tpu.memory_space<vmem>>, %arg3: memref<1x8x2048xf32, #tpu.memory_space<vmem>>, %arg4: memref<1x8x2048xf32, #tpu.memory_space<vmem>>) attributes {dimension_semantics = [#tpu.dimension_semantics<parallel>], iteration_bounds = array<i64: 2>, scalar_prefetch = 0 : i64, scratch_operands = 0 : i64, tpu.core_type = #tpu.core_type<tc>, window_params = [{transform_indices = @transform_0, window_bounds = array<i64: 1, 256, 2048>}, {pipeline_mode = #tpu.pipeline_mode<synchronous>, transform_indices = @transform_1, window_bounds = array<i64: 8, 256>}, {transform_indices = @transform_2, window_bounds = array<i64: 1, 8, 2048>}, {transform_indices = @transform_3, window_bounds = array<i64: 1, 8, 2048>}]} {
    %c0 = arith.constant 0 : index
    %c0_0 = arith.constant 0 : index
    %0 = vector.load %arg2[%c0, %c0_0] : memref<8x256xbf16, #tpu.memory_space<vmem>>, vector<8x256xbf16>
    %c0_1 = arith.constant 0 : index
    %c0_2 = arith.constant 0 : index
    %c0_3 = arith.constant 0 : index
    %1 = vector.load %arg1[%c0_1, %c0_2, %c0_3] : memref<1x256x2048xbf16, #tpu.memory_space<vmem>>, vector<1x256x2048xbf16>
    %2 = vector.shape_cast %1 : vector<1x256x2048xbf16> to vector<256x2048xbf16>
    %cst = arith.constant dense<0.000000e+00> : vector<8x2048xf32>
    %3 = tpu.matmul %0, %2, %cst {dimension_numbers = #tpu.dot_dimension_numbers<[1], [0], [0], [1], [0, 0, 1, 1], [], []>} : vector<8x256xbf16>, vector<256x2048xbf16>, vector<8x2048xf32> -> vector<8x2048xf32>
    %cst_4 = arith.constant dense<0.000000e+00> : vector<8xf32>
    %4 = vector.multi_reduction <add>, %3, %cst_4 [1] : vector<8x2048xf32> to vector<8xf32>
    %5 = vector.shape_cast %4 : vector<8xf32> to vector<8x1xf32>
    %cst_5 = arith.constant 4.8828125E-4 : f32
    %6 = vector.broadcast %cst_5 : f32 to vector<8x1xf32>
    %7 = arith.mulf %5, %6 : vector<8x1xf32>
    %8 = vector.broadcast %7 : vector<8x1xf32> to vector<8x2048xf32>
    %9 = arith.subf %3, %8 : vector<8x2048xf32>
    %10 = arith.mulf %9, %9 : vector<8x2048xf32>
    %cst_6 = arith.constant dense<0.000000e+00> : vector<8xf32>
    %11 = vector.multi_reduction <add>, %10, %cst_6 [1] : vector<8x2048xf32> to vector<8xf32>
    %12 = vector.shape_cast %11 : vector<8xf32> to vector<8x1xf32>
    %13 = arith.mulf %7, %7 : vector<8x1xf32>
    %cst_7 = arith.constant 0.000000e+00 : f32
    %14 = vector.broadcast %cst_7 : f32 to vector<8x1xf32>
    %15 = arith.mulf %14, %13 : vector<8x1xf32>
    %16 = arith.subf %12, %15 : vector<8x1xf32>
    %cst_8 = arith.constant 4.8828125E-4 : f32
    %17 = vector.broadcast %cst_8 : f32 to vector<8x1xf32>
    %18 = arith.mulf %16, %17 : vector<8x1xf32>
    %cst_9 = arith.constant 0.000000e+00 : f32
    %19 = vector.broadcast %cst_9 : f32 to vector<8x1xf32>
    %20 = arith.maximumf %18, %19 : vector<8x1xf32>
    %cst_10 = arith.constant 9.99999974E-6 : f32
    %21 = vector.broadcast %cst_10 : f32 to vector<8x1xf32>
    %22 = arith.addf %20, %21 : vector<8x1xf32>
    %23 = math.rsqrt %22 : vector<8x1xf32>
    %24 = vector.broadcast %23 : vector<8x1xf32> to vector<8x2048xf32>
    %25 = arith.mulf %9, %24 : vector<8x2048xf32>
    %cst_11 = arith.constant 0.000000e+00 : f32
    %26 = vector.broadcast %cst_11 : f32 to vector<8x2048xf32>
    %27 = arith.cmpf oge, %25, %26 : vector<8x2048xf32>
    %cst_12 = arith.constant 0.00999999977 : f32
    %28 = vector.broadcast %cst_12 : f32 to vector<8x2048xf32>
    %29 = arith.mulf %28, %25 : vector<8x2048xf32>
    %30 = arith.select %27, %25, %29 : vector<8x2048xi1>, vector<8x2048xf32>
    %c0_13 = arith.constant 0 : index
    %c0_14 = arith.constant 0 : index
    %c0_15 = arith.constant 0 : index
    %31 = vector.load %arg3[%c0_13, %c0_14, %c0_15] : memref<1x8x2048xf32, #tpu.memory_space<vmem>>, vector<1x8x2048xf32>
    %32 = vector.shape_cast %31 : vector<1x8x2048xf32> to vector<8x2048xf32>
    %33 = arith.addf %30, %32 : vector<8x2048xf32>
    %c0_16 = arith.constant 0 : index
    %c0_17 = arith.constant 0 : index
    %c0_18 = arith.constant 0 : index
    %34 = vector.load %arg4[%c0_16, %c0_17, %c0_18] : memref<1x8x2048xf32, #tpu.memory_space<vmem>>, vector<1x8x2048xf32>
    %35 = vector.shape_cast %34 : vector<1x8x2048xf32> to vector<8x2048xf32>
    %36 = vector.shape_cast %33 : vector<8x2048xf32> to vector<1x8x2048xf32>
    tpu.vector_store %arg4[%c0_16, %c0_17, %c0_18], %36 {strides = array<i32>} : memref<1x8x2048xf32, #tpu.memory_space<vmem>>, vector<1x8x2048xf32>,
    return
  }
  func.func @transform_0(%arg0: i32) -> (i32, i32, i32) {
    %c0_i32 = arith.constant 0 : i32
    %c0_i32_0 = arith.constant 0 : i32
    %c0_i32_1 = arith.constant 0 : i32
    return %arg0, %c0_i32, %c0_i32_0 : i32, i32, i32
  }
  func.func @transform_1(%arg0: i32) -> (i32, i32) {
    %c0_i32 = arith.constant 0 : i32
    %c0_i32_0 = arith.constant 0 : i32
    %c0_i32_1 = arith.constant 0 : i32
    return %c0_i32, %c0_i32_0 : i32, i32
  }
  func.func @transform_2(%arg0: i32) -> (i32, i32, i32) {
    %c0_i32 = arith.constant 0 : i32
    %c0_i32_0 = arith.constant 0 : i32
    %c0_i32_1 = arith.constant 0 : i32
    return %arg0, %c0_i32, %c0_i32_0 : i32, i32, i32
  }
  func.func @transform_3(%arg0: i32) -> (i32, i32, i32) {
    %c0_i32 = arith.constant 0 : i32
    %c0_i32_0 = arith.constant 0 : i32
    %c0_i32_1 = arith.constant 0 : i32
    return %arg0, %c0_i32, %c0_i32_0 : i32, i32, i32
  }
}

module attributes {stable_mosaic.version = 11 : i64} {
  func.func @_fused_kernel(%arg0: i32, %arg1: memref<1x256x256xbf16, #tpu.memory_space<vmem>>, %arg2: memref<16x256xbf16, #tpu.memory_space<vmem>>, %arg3: memref<1x16x256xf32, #tpu.memory_space<vmem>>) attributes {dimension_semantics = [#tpu.dimension_semantics<parallel>], iteration_bounds = array<i64: 2>, scalar_prefetch = 0 : i64, scratch_operands = 0 : i64, tpu.core_type = #tpu.core_type<tc>, window_params = [{transform_indices = @transform_0, window_bounds = array<i64: 1, 256, 256>}, {pipeline_mode = #tpu.pipeline_mode<synchronous>, transform_indices = @transform_1, window_bounds = array<i64: 16, 256>}, {transform_indices = @transform_2, window_bounds = array<i64: 1, 16, 256>}]} {
    %c0 = arith.constant 0 : index
    %c0_0 = arith.constant 0 : index
    %0 = vector.load %arg2[%c0, %c0_0] : memref<16x256xbf16, #tpu.memory_space<vmem>>, vector<16x256xbf16>
    %c0_1 = arith.constant 0 : index
    %c0_2 = arith.constant 0 : index
    %c0_3 = arith.constant 0 : index
    %1 = vector.load %arg1[%c0_1, %c0_2, %c0_3] : memref<1x256x256xbf16, #tpu.memory_space<vmem>>, vector<1x256x256xbf16>
    %2 = vector.shape_cast %1 : vector<1x256x256xbf16> to vector<256x256xbf16>
    %cst = arith.constant dense<0.000000e+00> : vector<16x256xf32>
    %3 = tpu.matmul %0, %2, %cst {dimension_numbers = #tpu.dot_dimension_numbers<[1], [0], [0], [1], [0, 0, 1, 1], [], []>} : vector<16x256xbf16>, vector<256x256xbf16>, vector<16x256xf32> -> vector<16x256xf32>
    %cst_4 = arith.constant dense<0.000000e+00> : vector<16xf32>
    %4 = vector.multi_reduction <add>, %3, %cst_4 [1] : vector<16x256xf32> to vector<16xf32>
    %5 = vector.shape_cast %4 : vector<16xf32> to vector<16x1xf32>
    %cst_5 = arith.constant 0.00680272094 : f32
    %6 = vector.broadcast %cst_5 : f32 to vector<16x1xf32>
    %7 = arith.mulf %5, %6 : vector<16x1xf32>
    %8 = vector.broadcast %7 : vector<16x1xf32> to vector<16x256xf32>
    %9 = arith.subf %3, %8 : vector<16x256xf32>
    %10 = arith.mulf %9, %9 : vector<16x256xf32>
    %cst_6 = arith.constant dense<0.000000e+00> : vector<16xf32>
    %11 = vector.multi_reduction <add>, %10, %cst_6 [1] : vector<16x256xf32> to vector<16xf32>
    %12 = vector.shape_cast %11 : vector<16xf32> to vector<16x1xf32>
    %13 = arith.mulf %7, %7 : vector<16x1xf32>
    %cst_7 = arith.constant 1.090000e+02 : f32
    %14 = vector.broadcast %cst_7 : f32 to vector<16x1xf32>
    %15 = arith.mulf %14, %13 : vector<16x1xf32>
    %16 = arith.subf %12, %15 : vector<16x1xf32>
    %cst_8 = arith.constant 0.00680272094 : f32
    %17 = vector.broadcast %cst_8 : f32 to vector<16x1xf32>
    %18 = arith.mulf %16, %17 : vector<16x1xf32>
    %cst_9 = arith.constant 0.000000e+00 : f32
    %19 = vector.broadcast %cst_9 : f32 to vector<16x1xf32>
    %20 = arith.maximumf %18, %19 : vector<16x1xf32>
    %cst_10 = arith.constant 9.99999974E-6 : f32
    %21 = vector.broadcast %cst_10 : f32 to vector<16x1xf32>
    %22 = arith.addf %20, %21 : vector<16x1xf32>
    %23 = math.rsqrt %22 : vector<16x1xf32>
    %24 = vector.broadcast %23 : vector<16x1xf32> to vector<16x256xf32>
    %25 = arith.mulf %9, %24 : vector<16x256xf32>
    %cst_11 = arith.constant 0.000000e+00 : f32
    %26 = vector.broadcast %cst_11 : f32 to vector<16x256xf32>
    %27 = arith.cmpf oge, %25, %26 : vector<16x256xf32>
    %cst_12 = arith.constant 0.00999999977 : f32
    %28 = vector.broadcast %cst_12 : f32 to vector<16x256xf32>
    %29 = arith.mulf %28, %25 : vector<16x256xf32>
    %30 = arith.select %27, %25, %29 : vector<16x256xi1>, vector<16x256xf32>
    %c0_13 = arith.constant 0 : index
    %c0_14 = arith.constant 0 : index
    %c0_15 = arith.constant 0 : index
    %31 = vector.load %arg3[%c0_13, %c0_14, %c0_15] : memref<1x16x256xf32, #tpu.memory_space<vmem>>, vector<1x16x256xf32>
    %32 = vector.shape_cast %31 : vector<1x16x256xf32> to vector<16x256xf32>
    %33 = vector.shape_cast %30 : vector<16x256xf32> to vector<1x16x256xf32>
    tpu.vector_store %arg3[%c0_13, %c0_14, %c0_15], %33 {strides = array<i32>} : memref<1x16x256xf32, #tpu.memory_space<vmem>>, vector<1x16x256xf32>,
    return
  }
  func.func @transform_0(%arg0: i32) -> (i32, i32, i32) {
    %c0_i32 = arith.constant 0 : i32
    %c0_i32_0 = arith.constant 0 : i32
    %c0_i32_1 = arith.constant 0 : i32
    return %arg0, %c0_i32, %c0_i32_0 : i32, i32, i32
  }
  func.func @transform_1(%arg0: i32) -> (i32, i32) {
    %c0_i32 = arith.constant 0 : i32
    %c0_i32_0 = arith.constant 0 : i32
    %c0_i32_1 = arith.constant 0 : i32
    return %c0_i32, %c0_i32_0 : i32, i32
  }
  func.func @transform_2(%arg0: i32) -> (i32, i32, i32) {
    %c0_i32 = arith.constant 0 : i32
    %c0_i32_0 = arith.constant 0 : i32
    %c0_i32_1 = arith.constant 0 : i32
    return %arg0, %c0_i32, %c0_i32_0 : i32, i32, i32
  }
}

</mosaic_0001>

<llo_original>
// kernel: downblock_forward.2
$region0: #{downblock_forward.2}
  #allocation0 [shape = 'u32[]', space=smem, size = 0x4, offset = 0x4, fixed_abs, tag = 'smem constant byte address 0x4 - core index']
  #allocation1 [shape = 'u32[144,128]{1,0:T(1,128)}', space=vmem, size = 0x12000, scoped, tag = 'internal scratch']
  %s0 = inlined_call_operand.vmem [shape: bf16[2,256,2048], index: 0, kind: input, shape index: {}]
  %s1 = inlined_call_operand.vmem [shape: bf16[8,256], index: 1, kind: input, shape index: {}]
  %s2 = inlined_call_operand.vmem [shape: f32[2,8,2048], index: 2, kind: input, shape index: {}]
  %s3 = inlined_call_operand.vmem [shape: f32[2,8,2048], index: 3, kind: output, shape index: {}]
  %s4 = sld [smem:[#allocation0]]
  $region45: #{downblock_forward.2} parent=0
    _
  %s6 = ssub.s32 1, %s4
  %s7 = scalar_select 0, %s6, %s4
  loop: start=0, step=1, limit=4
  $region2: #{downblock_forward.2} parent=0 // loop_pre_header
    _
  $region3: #{downblock_forward.2} parent=0 // loop_header
    %s9 = sphi 0, %s13
    %p10 = scmp.ge.s32.totalorder %s9, 4
    %s19 = sphi 0, %s21
    %s22 = sphi 0, %s19
    %s23 = sphi 0, %s22
    %s39 = sphi 0, %s23
    %s43 = sphi 0, %s43
    %s45 = sphi 0, %s43
    %s46 = sphi 0, %s45
    %s60 = sphi 0, %s46
    %s66 = sphi 0, %s68
    %s69 = sphi 0, %s66
    %s70 = sphi 0, %s69
    %s86 = sphi 0, %s70
    %s92 = sphi 0, %s94
    %s95 = sphi 0, %s92
    %s96 = sphi 0, %s95
    %s112 = sphi 0, %s96
  $region4: #{downblock_forward.2} parent=0 // loop_header_branch
    %12 = sbr.rel (%p10) target = $region8
  $region5: #{downblock_forward.2} parent=0 // loop_body
    %s14 = ssub.s32 %s9, 1
    %s15 = ssub.s32 %s9, 2
    %s16 = sadd.s32 %s9, 1
    %s17 = ssub.s32 %s9, %s16
    %p18 = scmp.eq.s32.totalorder %s17, 0
    %s20 = sadd.s32 %s19, 1
    %s21 = scalar_select %p18, %s19, %s20
    %p24 = pneg %p18
    %p25 = scmp.eq.s32.totalorder %s9, 1
    %p26 = por %p24, %p25
    %p27 = scmp.ne.s32.totalorder %s19, %s22
    %p28 = scmp.eq.s32.totalorder %s9, 0
    %p29 = por %p27, %p28
    %p30 = scmp.ne.s32.totalorder %s19, %s22
    %p31 = scmp.eq.s32.totalorder %s14, 1
    %p32 = por %p30, %p31
    %p33 = scmp.ne.s32.totalorder %s22, %s23
    %p34 = scmp.eq.s32.totalorder %s14, 0
    %p35 = por %p33, %p34
    %p36 = scmp.ne.s32.totalorder %s22, %s23
    %p37 = scmp.eq.s32.totalorder %s15, 1
    %p38 = por %p36, %p37
    %p40 = scmp.ne.s32.totalorder %s23, %s39
    %p41 = scmp.eq.s32.totalorder %s15, 0
    %p42 = por %p40, %p41
    %s44 = sadd.s32 %s43, 1
    %p47 = scmp.eq.s32.totalorder %s9, 1
    %p48 = scmp.ne.s32.totalorder %s43, %s45
    %p49 = scmp.eq.s32.totalorder %s9, 0
    %p50 = por %p48, %p49
    %p51 = scmp.ne.s32.totalorder %s43, %s45
    %p52 = scmp.eq.s32.totalorder %s14, 1
    %p53 = por %p51, %p52
    %p54 = scmp.ne.s32.totalorder %s45, %s46
    %p55 = scmp.eq.s32.totalorder %s14, 0
    %p56 = por %p54, %p55
    %p57 = scmp.ne.s32.totalorder %s45, %s46
    %p58 = scmp.eq.s32.totalorder %s15, 1
    %p59 = por %p57, %p58
    %p61 = scmp.ne.s32.totalorder %s46, %s60
    %p62 = scmp.eq.s32.totalorder %s15, 0
    %p63 = por %p61, %p62
    %s64 = ssub.s32 %s9, %s16
    %p65 = scmp.eq.s32.totalorder %s64, 0
    %s67 = sadd.s32 %s66, 1
    %s68 = scalar_select %p65, %s66, %s67
    %p71 = pneg %p65
    %p72 = scmp.eq.s32.totalorder %s9, 1
    %p73 = por %p71, %p72
    %p74 = scmp.ne.s32.totalorder %s66, %s69
    %p75 = scmp.eq.s32.totalorder %s9, 0
    %p76 = por %p74, %p75
    %p77 = scmp.ne.s32.totalorder %s66, %s69
    %p78 = scmp.eq.s32.totalorder %s14, 1
    %p79 = por %p77, %p78
    %p80 = scmp.ne.s32.totalorder %s69, %s70
    %p81 = scmp.eq.s32.totalorder %s14, 0
    %p82 = por %p80, %p81
    %p83 = scmp.ne.s32.totalorder %s69, %s70
    %p84 = scmp.eq.s32.totalorder %s15, 1
    %p85 = por %p83, %p84
    %p87 = scmp.ne.s32.totalorder %s70, %s86
    %p88 = scmp.eq.s32.totalorder %s15, 0
    %p89 = por %p87, %p88
    %s90 = ssub.s32 %s9, %s16
    %p91 = scmp.eq.s32.totalorder %s90, 0
    %s93 = sadd.s32 %s92, 1
    %s94 = scalar_select %p91, %s92, %s93
    %p97 = pneg %p91
    %p98 = scmp.eq.s32.totalorder %s9, 1
    %p99 = por %p97, %p98
    %p100 = scmp.ne.s32.totalorder %s92, %s95
    %p101 = scmp.eq.s32.totalorder %s9, 0
    %p102 = por %p100, %p101
    %p103 = scmp.ne.s32.totalorder %s92, %s95
    %p104 = scmp.eq.s32.totalorder %s14, 1
    %p105 = por %p103, %p104
    %p106 = scmp.ne.s32.totalorder %s95, %s96
    %p107 = scmp.eq.s32.totalorder %s14, 0
    %p108 = por %p106, %p107
    %p109 = scmp.ne.s32.totalorder %s95, %s96
    %p110 = scmp.eq.s32.totalorder %s15, 1
    %p111 = por %p109, %p110
    %p113 = scmp.ne.s32.totalorder %s96, %s112
    %p114 = scmp.eq.s32.totalorder %s15, 0
    %p115 = por %p113, %p114
    %p116 = scmp.le.s32.totalorder 1, %s9
    %p117 = scmp.lt.s32.totalorder %s9, 3
    %p118 = pnand %p116, %p117
    %p119 = pneg %p118
    // Predicated region
    $region9: #{downblock_forward.2} parent=5 // pred_check
      _
    $region10: #{downblock_forward.2} parent=5 // pred_check_branch
      %121 = sbr.rel (%p118) target = $region12
    $region11: #{downblock_forward.2} parent=5 // pred_region
      %s122 = ssub.s32 %s9, 1
      // Predicated region
      $region13: #{downblock_forward.2} parent=11 // pred_check
        %p123 = pneg %p56
      $region14: #{downblock_forward.2} parent=11 // pred_check_branch
        %125 = sbr.rel (%p123) target = $region16
      $region15: #{downblock_forward.2} parent=11 // pred_region
        _
      $region16: #{downblock_forward.2} parent=11 // pred_fallthru
        _
    $region12: #{downblock_forward.2} parent=5 // pred_fallthru
      _
    %p126 = scmp.lt.s32.totalorder %s9, 2
    // Predicated region
    $region17: #{downblock_forward.2} parent=5 // pred_check
      %p127 = pneg %p126
    $region18: #{downblock_forward.2} parent=5 // pred_check_branch
      %129 = sbr.rel (%p127) target = $region20
    $region19: #{downblock_forward.2} parent=5 // pred_region
      // Predicated region
      $region21: #{downblock_forward.2} parent=19 // pred_check
        %p130 = pneg %p29
      $region22: #{downblock_forward.2} parent=19 // pred_check_branch
        %132 = sbr.rel (%p130) target = $region24
      $region23: #{downblock_forward.2} parent=19 // pred_region
        %p133 = scmp.lt.s32.totalorder %s9, 1
        %s134 = scalar_select %p133, %s9, 1
        %s135 = smul.addr %s134, 512
        %s136 = smul.addr %s135, 4
        %s137 = scalar_lea.vmem %s0, %s136
      $region24: #{downblock_forward.2} parent=19 // pred_fallthru
        _
      // Predicated region
      $region25: #{downblock_forward.2} parent=19 // pred_check
        %p138 = pneg %p76
      $region26: #{downblock_forward.2} parent=19 // pred_check_branch
        %140 = sbr.rel (%p138) target = $region28
      $region27: #{downblock_forward.2} parent=19 // pred_region
        %p141 = scmp.lt.s32.totalorder %s9, 1
        %s142 = scalar_select %p141, %s9, 1
        %s143 = smul.addr %s142, 16
        %s144 = smul.addr %s143, 8
        %s145 = scalar_lea.vmem %s2, %s144
      $region28: #{downblock_forward.2} parent=19 // pred_fallthru
        _
    $region20: #{downblock_forward.2} parent=5 // pred_fallthru
      _
    %p146 = scmp.le.s32.totalorder 1, %s9
    %p147 = scmp.lt.s32.totalorder %s9, 3
    %p148 = pnand %p146, %p147
    %p149 = pneg %p148
    // Predicated region
    $region29: #{downblock_forward.2} parent=5 // pred_check
      _
    $region30: #{downblock_forward.2} parent=5 // pred_check_branch
      %151 = sbr.rel (%p148) target = $region32
    $region31: #{downblock_forward.2} parent=5 // pred_region
      %s152 = ssub.s32 %s9, 1
      %p153 = scmp.lt.s32.totalorder %s14, 1
      %s154 = scalar_select %p153, %s14, 1
      %s155 = smul.addr %s154, 512
      %s156 = smul.addr %s155, 4
      %s157 = scalar_lea.vmem %s0, %s156
      %p158 = pneg %p35
      %p159 = pneg %p32
      %p160 = pneg %p56
      %p161 = pneg %p53
      %p162 = scmp.lt.s32.totalorder %s14, 1
      %s163 = scalar_select %p162, %s14, 1
      %s164 = smul.addr %s163, 16
      %s165 = smul.addr %s164, 8
      %s166 = scalar_lea.vmem %s2, %s165
      %p167 = pneg %p82
      %p168 = pneg %p79
      %p169 = pneg %p108
      %p170 = pneg %p105
      %p171 = scmp.lt.s32.totalorder %s14, 1
      %s172 = scalar_select %p171, %s14, 1
      %s173 = smul.addr %s172, 16
      %s174 = smul.addr %s173, 8
      %s175 = scalar_lea.vmem %s3, %s174
      %p176 = scmp.lt.s32.totalorder %s14, 1
      %s177 = scalar_select %p176, %s14, 1
      %s178 = smul.addr %s177, 512
      %s179 = smul.addr %s178, 4
      %s180 = scalar_lea.vmem %s0, %s179
      %p181 = scmp.lt.s32.totalorder %s14, 1
      %s182 = scalar_select %p181, %s14, 1
      %s183 = smul.addr %s182, 16
      %s184 = smul.addr %s183, 8
      %s185 = scalar_lea.vmem %s2, %s184
      %p186 = scmp.lt.s32.totalorder %s14, 1
      %s187 = scalar_select %p186, %s14, 1
      %s188 = smul.addr %s187, 16
      %s189 = smul.addr %s188, 8
      %s190 = scalar_lea.vmem %s3, %s189
      %v191 = vld [vmem:[%s1] sm:$0xff]
      %v192 = vld [vmem:[%s180] sm:$0xff]
      %v193 = vld [vmem:[%s180 + $0x8] sm:$0xff]
      %v194 = vld [vmem:[%s180 + $0x10] sm:$0xff]
      %v195 = vld [vmem:[%s180 + $0x18] sm:$0xff]
      %v196 = vld [vmem:[%s180 + $0x20] sm:$0xff]
      %v197 = vld [vmem:[%s180 + $0x28] sm:$0xff]
      %v198 = vld [vmem:[%s180 + $0x30] sm:$0xff]
      %v199 = vld [vmem:[%s180 + $0x38] sm:$0xff]
      %v200 = vld [vmem:[%s180 + $0x40] sm:$0xff]
      %v201 = vld [vmem:[%s180 + $0x48] sm:$0xff]
      %v202 = vld [vmem:[%s180 + $0x50] sm:$0xff]
      %v203 = vld [vmem:[%s180 + $0x58] sm:$0xff]
      %v204 = vld [vmem:[%s180 + $0x60] sm:$0xff]
      %v205 = vld [vmem:[%s180 + $0x68] sm:$0xff]
      %v206 = vld [vmem:[%s180 + $0x70] sm:$0xff]
      %v207 = vld [vmem:[%s180 + $0x78] sm:$0xff]
      %v208 = vld [vmem:[%s180 + $0x80] sm:$0xff]
      %v209 = vld [vmem:[%s180 + $0x88] sm:$0xff]
      %v210 = vld [vmem:[%s180 + $0x90] sm:$0xff]
      %v211 = vld [vmem:[%s180 + $0x98] sm:$0xff]
      %v212 = vld [vmem:[%s180 + $0xa0] sm:$0xff]
      %v213 = vld [vmem:[%s180 + $0xa8] sm:$0xff]
      %v214 = vld [vmem:[%s180 + $0xb0] sm:$0xff]
      %v215 = vld [vmem:[%s180 + $0xb8] sm:$0xff]
      %v216 = vld [vmem:[%s180 + $0xc0] sm:$0xff]
      %v217 = vld [vmem:[%s180 + $0xc8] sm:$0xff]
      %v218 = vld [vmem:[%s180 + $0xd0] sm:$0xff]
      %v219 = vld [vmem:[%s180 + $0xd8] sm:$0xff]
      %v220 = vld [vmem:[%s180 + $0xe0] sm:$0xff]
      %v221 = vld [vmem:[%s180 + $0xe8] sm:$0xff]
      %v222 = vld [vmem:[%s180 + $0xf0] sm:$0xff]
      %v223 = vld [vmem:[%s180 + $0xf8] sm:$0xff]
      %v224 = vld [vmem:[%s180 + $0x100] sm:$0xff]
      %v225 = vld [vmem:[%s180 + $0x108] sm:$0xff]
      %v226 = vld [vmem:[%s180 + $0x110] sm:$0xff]
      %v227 = vld [vmem:[%s180 + $0x118] sm:$0xff]
      %v228 = vld [vmem:[%s180 + $0x120] sm:$0xff]
      %v229 = vld [vmem:[%s180 + $0x128] sm:$0xff]
      %v230 = vld [vmem:[%s180 + $0x130] sm:$0xff]
      %v231 = vld [vmem:[%s180 + $0x138] sm:$0xff]
      %v232 = vld [vmem:[%s180 + $0x140] sm:$0xff]
      %v233 = vld [vmem:[%s180 + $0x148] sm:$0xff]
      %v234 = vld [vmem:[%s180 + $0x150] sm:$0xff]
      %v235 = vld [vmem:[%s180 + $0x158] sm:$0xff]
      %v236 = vld [vmem:[%s180 + $0x160] sm:$0xff]
      %v237 = vld [vmem:[%s180 + $0x168] sm:$0xff]
      %v238 = vld [vmem:[%s180 + $0x170] sm:$0xff]
      %v239 = vld [vmem:[%s180 + $0x178] sm:$0xff]
      %v240 = vld [vmem:[%s180 + $0x180] sm:$0xff]
      %v241 = vld [vmem:[%s180 + $0x188] sm:$0xff]
      %v242 = vld [vmem:[%s180 + $0x190] sm:$0xff]
      %v243 = vld [vmem:[%s180 + $0x198] sm:$0xff]
      %v244 = vld [vmem:[%s180 + $0x1a0] sm:$0xff]
      %v245 = vld [vmem:[%s180 + $0x1a8] sm:$0xff]
      %v246 = vld [vmem:[%s180 + $0x1b0] sm:$0xff]
      %v247 = vld [vmem:[%s180 + $0x1b8] sm:$0xff]
      %v248 = vld [vmem:[%s180 + $0x1c0] sm:$0xff]
      %v249 = vld [vmem:[%s180 + $0x1c8] sm:$0xff]
      %v250 = vld [vmem:[%s180 + $0x1d0] sm:$0xff]
      %v251 = vld [vmem:[%s180 + $0x1d8] sm:$0xff]
      %v252 = vld [vmem:[%s180 + $0x1e0] sm:$0xff]
      %v253 = vld [vmem:[%s180 + $0x1e8] sm:$0xff]
      %v254 = vld [vmem:[%s180 + $0x1f0] sm:$0xff]
      %v255 = vld [vmem:[%s180 + $0x1f8] sm:$0xff]
      %v256 = vld [vmem:[%s180 + $0x200] sm:$0xff]
      %v257 = vld [vmem:[%s180 + $0x208] sm:$0xff]
      %v258 = vld [vmem:[%s180 + $0x210] sm:$0xff]
      %v259 = vld [vmem:[%s180 + $0x218] sm:$0xff]
      %v260 = vld [vmem:[%s180 + $0x220] sm:$0xff]
      %v261 = vld [vmem:[%s180 + $0x228] sm:$0xff]
      %v262 = vld [vmem:[%s180 + $0x230] sm:$0xff]
      %v263 = vld [vmem:[%s180 + $0x238] sm:$0xff]
      %v264 = vld [vmem:[%s180 + $0x240] sm:$0xff]
      %v265 = vld [vmem:[%s180 + $0x248] sm:$0xff]
      %v266 = vld [vmem:[%s180 + $0x250] sm:$0xff]
      %v267 = vld [vmem:[%s180 + $0x258] sm:$0xff]
      %v268 = vld [vmem:[%s180 + $0x260] sm:$0xff]
      %v269 = vld [vmem:[%s180 + $0x268] sm:$0xff]
      %v270 = vld [vmem:[%s180 + $0x270] sm:$0xff]
      %v271 = vld [vmem:[%s180 + $0x278] sm:$0xff]
      %v272 = vld [vmem:[%s180 + $0x280] sm:$0xff]
      %v273 = vld [vmem:[%s180 + $0x288] sm:$0xff]
      %v274 = vld [vmem:[%s180 + $0x290] sm:$0xff]
      %v275 = vld [vmem:[%s180 + $0x298] sm:$0xff]
      %v276 = vld [vmem:[%s180 + $0x2a0] sm:$0xff]
      %v277 = vld [vmem:[%s180 + $0x2a8] sm:$0xff]
      %v278 = vld [vmem:[%s180 + $0x2b0] sm:$0xff]
      %v279 = vld [vmem:[%s180 + $0x2b8] sm:$0xff]
      %v280 = vld [vmem:[%s180 + $0x2c0] sm:$0xff]
      %v281 = vld [vmem:[%s180 + $0x2c8] sm:$0xff]
      %v282 = vld [vmem:[%s180 + $0x2d0] sm:$0xff]
      %v283 = vld [vmem:[%s180 + $0x2d8] sm:$0xff]
      %v284 = vld [vmem:[%s180 + $0x2e0] sm:$0xff]
      %v285 = vld [vmem:[%s180 + $0x2e8] sm:$0xff]
      %v286 = vld [vmem:[%s180 + $0x2f0] sm:$0xff]
      %v287 = vld [vmem:[%s180 + $0x2f8] sm:$0xff]
      %v288 = vld [vmem:[%s180 + $0x300] sm:$0xff]
      %v289 = vld [vmem:[%s180 + $0x308] sm:$0xff]
      %v290 = vld [vmem:[%s180 + $0x310] sm:$0xff]
      %v291 = vld [vmem:[%s180 + $0x318] sm:$0xff]
      %v292 = vld [vmem:[%s180 + $0x320] sm:$0xff]
      %v293 = vld [vmem:[%s180 + $0x328] sm:$0xff]
      %v294 = vld [vmem:[%s180 + $0x330] sm:$0xff]
      %v295 = vld [vmem:[%s180 + $0x338] sm:$0xff]
      %v296 = vld [vmem:[%s180 + $0x340] sm:$0xff]
      %v297 = vld [vmem:[%s180 + $0x348] sm:$0xff]
      %v298 = vld [vmem:[%s180 + $0x350] sm:$0xff]
      %v299 = vld [vmem:[%s180 + $0x358] sm:$0xff]
      %v300 = vld [vmem:[%s180 + $0x360] sm:$0xff]
      %v301 = vld [vmem:[%s180 + $0x368] sm:$0xff]
      %v302 = vld [vmem:[%s180 + $0x370] sm:$0xff]
      %v303 = vld [vmem:[%s180 + $0x378] sm:$0xff]
      %v304 = vld [vmem:[%s180 + $0x380] sm:$0xff]
      %v305 = vld [vmem:[%s180 + $0x388] sm:$0xff]
      %v306 = vld [vmem:[%s180 + $0x390] sm:$0xff]
      %v307 = vld [vmem:[%s180 + $0x398] sm:$0xff]
      %v308 = vld [vmem:[%s180 + $0x3a0] sm:$0xff]
      %v309 = vld [vmem:[%s180 + $0x3a8] sm:$0xff]
      %v310 = vld [vmem:[%s180 + $0x3b0] sm:$0xff]
      %v311 = vld [vmem:[%s180 + $0x3b8] sm:$0xff]
      %v312 = vld [vmem:[%s180 + $0x3c0] sm:$0xff]
      %v313 = vld [vmem:[%s180 + $0x3c8] sm:$0xff]
      %v314 = vld [vmem:[%s180 + $0x3d0] sm:$0xff]
      %v315 = vld [vmem:[%s180 + $0x3d8] sm:$0xff]
      %v316 = vld [vmem:[%s180 + $0x3e0] sm:$0xff]
      %v317 = vld [vmem:[%s180 + $0x3e8] sm:$0xff]
      %v318 = vld [vmem:[%s180 + $0x3f0] sm:$0xff]
      %v319 = vld [vmem:[%s180 + $0x3f8] sm:$0xff]
      %v320 = vld [vmem:[%s180 + $0x400] sm:$0xff]
      %v321 = vld [vmem:[%s180 + $0x408] sm:$0xff]
      %v322 = vld [vmem:[%s180 + $0x410] sm:$0xff]
      %v323 = vld [vmem:[%s180 + $0x418] sm:$0xff]
      %v324 = vld [vmem:[%s180 + $0x420] sm:$0xff]
      %v325 = vld [vmem:[%s180 + $0x428] sm:$0xff]
      %v326 = vld [vmem:[%s180 + $0x430] sm:$0xff]
      %v327 = vld [vmem:[%s180 + $0x438] sm:$0xff]
      %v328 = vld [vmem:[%s180 + $0x440] sm:$0xff]
      %v329 = vld [vmem:[%s180 + $0x448] sm:$0xff]
      %v330 = vld [vmem:[%s180 + $0x450] sm:$0xff]
      %v331 = vld [vmem:[%s180 + $0x458] sm:$0xff]
      %v332 = vld [vmem:[%s180 + $0x460] sm:$0xff]
      %v333 = vld [vmem:[%s180 + $0x468] sm:$0xff]
      %v334 = vld [vmem:[%s180 + $0x470] sm:$0xff]
      %v335 = vld [vmem:[%s180 + $0x478] sm:$0xff]
      %v336 = vld [vmem:[%s180 + $0x480] sm:$0xff]
      %v337 = vld [vmem:[%s180 + $0x488] sm:$0xff]
      %v338 = vld [vmem:[%s180 + $0x490] sm:$0xff]
      %v339 = vld [vmem:[%s180 + $0x498] sm:$0xff]
      %v340 = vld [vmem:[%s180 + $0x4a0] sm:$0xff]
      %v341 = vld [vmem:[%s180 + $0x4a8] sm:$0xff]
      %v342 = vld [vmem:[%s180 + $0x4b0] sm:$0xff]
      %v343 = vld [vmem:[%s180 + $0x4b8] sm:$0xff]
      %v344 = vld [vmem:[%s180 + $0x4c0] sm:$0xff]
      %v345 = vld [vmem:[%s180 + $0x4c8] sm:$0xff]
      %v346 = vld [vmem:[%s180 + $0x4d0] sm:$0xff]
      %v347 = vld [vmem:[%s180 + $0x4d8] sm:$0xff]
      %v348 = vld [vmem:[%s180 + $0x4e0] sm:$0xff]
      %v349 = vld [vmem:[%s180 + $0x4e8] sm:$0xff]
      %v350 = vld [vmem:[%s180 + $0x4f0] sm:$0xff]
      %v351 = vld [vmem:[%s180 + $0x4f8] sm:$0xff]
      %v352 = vld [vmem:[%s180 + $0x500] sm:$0xff]
      %v353 = vld [vmem:[%s180 + $0x508] sm:$0xff]
      %v354 = vld [vmem:[%s180 + $0x510] sm:$0xff]
      %v355 = vld [vmem:[%s180 + $0x518] sm:$0xff]
      %v356 = vld [vmem:[%s180 + $0x520] sm:$0xff]
      %v357 = vld [vmem:[%s180 + $0x528] sm:$0xff]
      %v358 = vld [vmem:[%s180 + $0x530] sm:$0xff]
      %v359 = vld [vmem:[%s180 + $0x538] sm:$0xff]
      %v360 = vld [vmem:[%s180 + $0x540] sm:$0xff]
      %v361 = vld [vmem:[%s180 + $0x548] sm:$0xff]
      %v362 = vld [vmem:[%s180 + $0x550] sm:$0xff]
      %v363 = vld [vmem:[%s180 + $0x558] sm:$0xff]
      %v364 = vld [vmem:[%s180 + $0x560] sm:$0xff]
      %v365 = vld [vmem:[%s180 + $0x568] sm:$0xff]
      %v366 = vld [vmem:[%s180 + $0x570] sm:$0xff]
      %v367 = vld [vmem:[%s180 + $0x578] sm:$0xff]
      %v368 = vld [vmem:[%s180 + $0x580] sm:$0xff]
      %v369 = vld [vmem:[%s180 + $0x588] sm:$0xff]
      %v370 = vld [vmem:[%s180 + $0x590] sm:$0xff]
      %v371 = vld [vmem:[%s180 + $0x598] sm:$0xff]
      %v372 = vld [vmem:[%s180 + $0x5a0] sm:$0xff]
      %v373 = vld [vmem:[%s180 + $0x5a8] sm:$0xff]
      %v374 = vld [vmem:[%s180 + $0x5b0] sm:$0xff]
      %v375 = vld [vmem:[%s180 + $0x5b8] sm:$0xff]
      %v376 = vld [vmem:[%s180 + $0x5c0] sm:$0xff]
      %v377 = vld [vmem:[%s180 + $0x5c8] sm:$0xff]
      %v378 = vld [vmem:[%s180 + $0x5d0] sm:$0xff]
      %v379 = vld [vmem:[%s180 + $0x5d8] sm:$0xff]
      %v380 = vld [vmem:[%s180 + $0x5e0] sm:$0xff]
      %v381 = vld [vmem:[%s180 + $0x5e8] sm:$0xff]
      %v382 = vld [vmem:[%s180 + $0x5f0] sm:$0xff]
      %v383 = vld [vmem:[%s180 + $0x5f8] sm:$0xff]
      %v384 = vld [vmem:[%s180 + $0x600] sm:$0xff]
      %v385 = vld [vmem:[%s180 + $0x608] sm:$0xff]
      %v386 = vld [vmem:[%s180 + $0x610] sm:$0xff]
      %v387 = vld [vmem:[%s180 + $0x618] sm:$0xff]
      %v388 = vld [vmem:[%s180 + $0x620] sm:$0xff]
      %v389 = vld [vmem:[%s180 + $0x628] sm:$0xff]
      %v390 = vld [vmem:[%s180 + $0x630] sm:$0xff]
      %v391 = vld [vmem:[%s180 + $0x638] sm:$0xff]
      %v392 = vld [vmem:[%s180 + $0x640] sm:$0xff]
      %v393 = vld [vmem:[%s180 + $0x648] sm:$0xff]
      %v394 = vld [vmem:[%s180 + $0x650] sm:$0xff]
      %v395 = vld [vmem:[%s180 + $0x658] sm:$0xff]
      %v396 = vld [vmem:[%s180 + $0x660] sm:$0xff]
      %v397 = vld [vmem:[%s180 + $0x668] sm:$0xff]
      %v398 = vld [vmem:[%s180 + $0x670] sm:$0xff]
      %v399 = vld [vmem:[%s180 + $0x678] sm:$0xff]
      %v400 = vld [vmem:[%s180 + $0x680] sm:$0xff]
      %v401 = vld [vmem:[%s180 + $0x688] sm:$0xff]
      %v402 = vld [vmem:[%s180 + $0x690] sm:$0xff]
      %v403 = vld [vmem:[%s180 + $0x698] sm:$0xff]
      %v404 = vld [vmem:[%s180 + $0x6a0] sm:$0xff]
      %v405 = vld [vmem:[%s180 + $0x6a8] sm:$0xff]
      %v406 = vld [vmem:[%s180 + $0x6b0] sm:$0xff]
      %v407 = vld [vmem:[%s180 + $0x6b8] sm:$0xff]
      %v408 = vld [vmem:[%s180 + $0x6c0] sm:$0xff]
      %v409 = vld [vmem:[%s180 + $0x6c8] sm:$0xff]
      %v410 = vld [vmem:[%s180 + $0x6d0] sm:$0xff]
      %v411 = vld [vmem:[%s180 + $0x6d8] sm:$0xff]
      %v412 = vld [vmem:[%s180 + $0x6e0] sm:$0xff]
      %v413 = vld [vmem:[%s180 + $0x6e8] sm:$0xff]
      %v414 = vld [vmem:[%s180 + $0x6f0] sm:$0xff]
      %v415 = vld [vmem:[%s180 + $0x6f8] sm:$0xff]
      %v416 = vld [vmem:[%s180 + $0x700] sm:$0xff]
      %v417 = vld [vmem:[%s180 + $0x708] sm:$0xff]
      %v418 = vld [vmem:[%s180 + $0x710] sm:$0xff]
      %v419 = vld [vmem:[%s180 + $0x718] sm:$0xff]
      %v420 = vld [vmem:[%s180 + $0x720] sm:$0xff]
      %v421 = vld [vmem:[%s180 + $0x728] sm:$0xff]
      %v422 = vld [vmem:[%s180 + $0x730] sm:$0xff]
      %v423 = vld [vmem:[%s180 + $0x738] sm:$0xff]
      %v424 = vld [vmem:[%s180 + $0x740] sm:$0xff]
      %v425 = vld [vmem:[%s180 + $0x748] sm:$0xff]
      %v426 = vld [vmem:[%s180 + $0x750] sm:$0xff]
      %v427 = vld [vmem:[%s180 + $0x758] sm:$0xff]
      %v428 = vld [vmem:[%s180 + $0x760] sm:$0xff]
      %v429 = vld [vmem:[%s180 + $0x768] sm:$0xff]
      %v430 = vld [vmem:[%s180 + $0x770] sm:$0xff]
      %v431 = vld [vmem:[%s180 + $0x778] sm:$0xff]
      %v432 = vld [vmem:[%s180 + $0x780] sm:$0xff]
      %v433 = vld [vmem:[%s180 + $0x788] sm:$0xff]
      %v434 = vld [vmem:[%s180 + $0x790] sm:$0xff]
      %v435 = vld [vmem:[%s180 + $0x798] sm:$0xff]
      %v436 = vld [vmem:[%s180 + $0x7a0] sm:$0xff]
      %v437 = vld [vmem:[%s180 + $0x7a8] sm:$0xff]
      %v438 = vld [vmem:[%s180 + $0x7b0] sm:$0xff]
      %v439 = vld [vmem:[%s180 + $0x7b8] sm:$0xff]
      %v440 = vld [vmem:[%s180 + $0x7c0] sm:$0xff]
      %v441 = vld [vmem:[%s180 + $0x7c8] sm:$0xff]
      %v442 = vld [vmem:[%s180 + $0x7d0] sm:$0xff]
      %v443 = vld [vmem:[%s180 + $0x7d8] sm:$0xff]
      %v444 = vld [vmem:[%s180 + $0x7e0] sm:$0xff]
      %v445 = vld [vmem:[%s180 + $0x7e8] sm:$0xff]
      %v446 = vld [vmem:[%s180 + $0x7f0] sm:$0xff]
      %v447 = vld [vmem:[%s180 + $0x7f8] sm:$0xff]
      %v449 = vunpack.c.l.b16 %v191
      %v450 = vunpack.c.h.b16 %v191
      %v451 = vpack.c.b16 %v449, %v449
      %v452 = vpack.c.b16 %v450, %v450
      %v711 = vunpack.c.l.b16 %v192
      %v712 = vunpack.c.h.b16 %v192
      %v713 = vunpack.c.l.b16 %v193
      %v714 = vunpack.c.h.b16 %v193
      %v715 = vunpack.c.l.b16 %v194
      %v716 = vunpack.c.h.b16 %v194
      %v717 = vunpack.c.l.b16 %v195
      %v718 = vunpack.c.h.b16 %v195
      %v719 = vunpack.c.l.b16 %v196
      %v720 = vunpack.c.h.b16 %v196
      %v721 = vunpack.c.l.b16 %v197
      %v722 = vunpack.c.h.b16 %v197
      %v723 = vunpack.c.l.b16 %v198
      %v724 = vunpack.c.h.b16 %v198
      %v725 = vunpack.c.l.b16 %v199
      %v726 = vunpack.c.h.b16 %v199
      %v727 = vunpack.c.l.b16 %v200
      %v728 = vunpack.c.h.b16 %v200
      %v729 = vunpack.c.l.b16 %v201
      %v730 = vunpack.c.h.b16 %v201
      %v731 = vunpack.c.l.b16 %v202
      %v732 = vunpack.c.h.b16 %v202
      %v733 = vunpack.c.l.b16 %v203
      %v734 = vunpack.c.h.b16 %v203
      %v735 = vunpack.c.l.b16 %v204
      %v736 = vunpack.c.h.b16 %v204
      %v737 = vunpack.c.l.b16 %v205
      %v738 = vunpack.c.h.b16 %v205
      %v739 = vunpack.c.l.b16 %v206
      %v740 = vunpack.c.h.b16 %v206
      %v741 = vunpack.c.l.b16 %v207
      %v742 = vunpack.c.h.b16 %v207
      %v743 = vunpack.c.l.b16 %v208
      %v744 = vunpack.c.h.b16 %v208
      %v745 = vunpack.c.l.b16 %v209
      %v746 = vunpack.c.h.b16 %v209
      %v747 = vunpack.c.l.b16 %v210
      %v748 = vunpack.c.h.b16 %v210
      %v749 = vunpack.c.l.b16 %v211
      %v750 = vunpack.c.h.b16 %v211
      %v751 = vunpack.c.l.b16 %v212
      %v752 = vunpack.c.h.b16 %v212
      %v753 = vunpack.c.l.b16 %v213
      %v754 = vunpack.c.h.b16 %v213
      %v755 = vunpack.c.l.b16 %v214
      %v756 = vunpack.c.h.b16 %v214
      %v757 = vunpack.c.l.b16 %v215
      %v758 = vunpack.c.h.b16 %v215
      %v759 = vunpack.c.l.b16 %v216
      %v760 = vunpack.c.h.b16 %v216
      %v761 = vunpack.c.l.b16 %v217
      %v762 = vunpack.c.h.b16 %v217
      %v763 = vunpack.c.l.b16 %v218
      %v764 = vunpack.c.h.b16 %v218
      %v765 = vunpack.c.l.b16 %v219
      %v766 = vunpack.c.h.b16 %v219
      %v767 = vunpack.c.l.b16 %v220
      %v768 = vunpack.c.h.b16 %v220
      %v769 = vunpack.c.l.b16 %v221
      %v770 = vunpack.c.h.b16 %v221
      %v771 = vunpack.c.l.b16 %v222
      %v772 = vunpack.c.h.b16 %v222
      %v773 = vunpack.c.l.b16 %v223
      %v774 = vunpack.c.h.b16 %v223
      %v775 = vunpack.c.l.b16 %v224
      %v776 = vunpack.c.h.b16 %v224
      %v777 = vunpack.c.l.b16 %v225
      %v778 = vunpack.c.h.b16 %v225
      %v779 = vunpack.c.l.b16 %v226
      %v780 = vunpack.c.h.b16 %v226
      %v781 = vunpack.c.l.b16 %v227
      %v782 = vunpack.c.h.b16 %v227
      %v783 = vunpack.c.l.b16 %v228
      %v784 = vunpack.c.h.b16 %v228
      %v785 = vunpack.c.l.b16 %v229
      %v786 = vunpack.c.h.b16 %v229
      %v787 = vunpack.c.l.b16 %v230
      %v788 = vunpack.c.h.b16 %v230
      %v789 = vunpack.c.l.b16 %v231
      %v790 = vunpack.c.h.b16 %v231
      %v791 = vunpack.c.l.b16 %v232
      %v792 = vunpack.c.h.b16 %v232
      %v793 = vunpack.c.l.b16 %v233
      %v794 = vunpack.c.h.b16 %v233
      %v795 = vunpack.c.l.b16 %v234
      %v796 = vunpack.c.h.b16 %v234
      %v797 = vunpack.c.l.b16 %v235
      %v798 = vunpack.c.h.b16 %v235
      %v799 = vunpack.c.l.b16 %v236
      %v800 = vunpack.c.h.b16 %v236
      %v801 = vunpack.c.l.b16 %v237
      %v802 = vunpack.c.h.b16 %v237
      %v803 = vunpack.c.l.b16 %v238
      %v804 = vunpack.c.h.b16 %v238
      %v805 = vunpack.c.l.b16 %v239
      %v806 = vunpack.c.h.b16 %v239
      %v807 = vunpack.c.l.b16 %v240
      %v808 = vunpack.c.h.b16 %v240
      %v809 = vunpack.c.l.b16 %v241
      %v810 = vunpack.c.h.b16 %v241
      %v811 = vunpack.c.l.b16 %v242
      %v812 = vunpack.c.h.b16 %v242
      %v813 = vunpack.c.l.b16 %v243
      %v814 = vunpack.c.h.b16 %v243
      %v815 = vunpack.c.l.b16 %v244
      %v816 = vunpack.c.h.b16 %v244
      %v817 = vunpack.c.l.b16 %v245
      %v818 = vunpack.c.h.b16 %v245
      %v819 = vunpack.c.l.b16 %v246
      %v820 = vunpack.c.h.b16 %v246
      %v821 = vunpack.c.l.b16 %v247
      %v822 = vunpack.c.h.b16 %v247
      %v823 = vunpack.c.l.b16 %v248
      %v824 = vunpack.c.h.b16 %v248
      %v825 = vunpack.c.l.b16 %v249
      %v826 = vunpack.c.h.b16 %v249
      %v827 = vunpack.c.l.b16 %v250
      %v828 = vunpack.c.h.b16 %v250
      %v829 = vunpack.c.l.b16 %v251
      %v830 = vunpack.c.h.b16 %v251
      %v831 = vunpack.c.l.b16 %v252
      %v832 = vunpack.c.h.b16 %v252
      %v833 = vunpack.c.l.b16 %v253
      %v834 = vunpack.c.h.b16 %v253
      %v835 = vunpack.c.l.b16 %v254
      %v836 = vunpack.c.h.b16 %v254
      %v837 = vunpack.c.l.b16 %v255
      %v838 = vunpack.c.h.b16 %v255
      %v839 = vunpack.c.l.b16 %v256
      %v840 = vunpack.c.h.b16 %v256
      %v841 = vunpack.c.l.b16 %v257
      %v842 = vunpack.c.h.b16 %v257
      %v843 = vunpack.c.l.b16 %v258
      %v844 = vunpack.c.h.b16 %v258
      %v845 = vunpack.c.l.b16 %v259
      %v846 = vunpack.c.h.b16 %v259
      %v847 = vunpack.c.l.b16 %v260
      %v848 = vunpack.c.h.b16 %v260
      %v849 = vunpack.c.l.b16 %v261
      %v850 = vunpack.c.h.b16 %v261
      %v851 = vunpack.c.l.b16 %v262
      %v852 = vunpack.c.h.b16 %v262
      %v853 = vunpack.c.l.b16 %v263
      %v854 = vunpack.c.h.b16 %v263
      %v855 = vunpack.c.l.b16 %v264
      %v856 = vunpack.c.h.b16 %v264
      %v857 = vunpack.c.l.b16 %v265
      %v858 = vunpack.c.h.b16 %v265
      %v859 = vunpack.c.l.b16 %v266
      %v860 = vunpack.c.h.b16 %v266
      %v861 = vunpack.c.l.b16 %v267
      %v862 = vunpack.c.h.b16 %v267
      %v863 = vunpack.c.l.b16 %v268
      %v864 = vunpack.c.h.b16 %v268
      %v865 = vunpack.c.l.b16 %v269
      %v866 = vunpack.c.h.b16 %v269
      %v867 = vunpack.c.l.b16 %v270
      %v868 = vunpack.c.h.b16 %v270
      %v869 = vunpack.c.l.b16 %v271
      %v870 = vunpack.c.h.b16 %v271
      %v871 = vunpack.c.l.b16 %v272
      %v872 = vunpack.c.h.b16 %v272
      %v873 = vunpack.c.l.b16 %v273
      %v874 = vunpack.c.h.b16 %v273
      %v875 = vunpack.c.l.b16 %v274
      %v876 = vunpack.c.h.b16 %v274
      %v877 = vunpack.c.l.b16 %v275
      %v878 = vunpack.c.h.b16 %v275
      %v879 = vunpack.c.l.b16 %v276
      %v880 = vunpack.c.h.b16 %v276
      %v881 = vunpack.c.l.b16 %v277
      %v882 = vunpack.c.h.b16 %v277
      %v883 = vunpack.c.l.b16 %v278
      %v884 = vunpack.c.h.b16 %v278
      %v885 = vunpack.c.l.b16 %v279
      %v886 = vunpack.c.h.b16 %v279
      %v887 = vunpack.c.l.b16 %v280
      %v888 = vunpack.c.h.b16 %v280
      %v889 = vunpack.c.l.b16 %v281
      %v890 = vunpack.c.h.b16 %v281
      %v891 = vunpack.c.l.b16 %v282
      %v892 = vunpack.c.h.b16 %v282
      %v893 = vunpack.c.l.b16 %v283
      %v894 = vunpack.c.h.b16 %v283
      %v895 = vunpack.c.l.b16 %v284
      %v896 = vunpack.c.h.b16 %v284
      %v897 = vunpack.c.l.b16 %v285
      %v898 = vunpack.c.h.b16 %v285
      %v899 = vunpack.c.l.b16 %v286
      %v900 = vunpack.c.h.b16 %v286
      %v901 = vunpack.c.l.b16 %v287
      %v902 = vunpack.c.h.b16 %v287
      %v903 = vunpack.c.l.b16 %v288
      %v904 = vunpack.c.h.b16 %v288
      %v905 = vunpack.c.l.b16 %v289
      %v906 = vunpack.c.h.b16 %v289
      %v907 = vunpack.c.l.b16 %v290
      %v908 = vunpack.c.h.b16 %v290
      %v909 = vunpack.c.l.b16 %v291
      %v910 = vunpack.c.h.b16 %v291
      %v911 = vunpack.c.l.b16 %v292
      %v912 = vunpack.c.h.b16 %v292
      %v913 = vunpack.c.l.b16 %v293
      %v914 = vunpack.c.h.b16 %v293
      %v915 = vunpack.c.l.b16 %v294
      %v916 = vunpack.c.h.b16 %v294
      %v917 = vunpack.c.l.b16 %v295
      %v918 = vunpack.c.h.b16 %v295
      %v919 = vunpack.c.l.b16 %v296
      %v920 = vunpack.c.h.b16 %v296
      %v921 = vunpack.c.l.b16 %v297
      %v922 = vunpack.c.h.b16 %v297
      %v923 = vunpack.c.l.b16 %v298
      %v924 = vunpack.c.h.b16 %v298
      %v925 = vunpack.c.l.b16 %v299
      %v926 = vunpack.c.h.b16 %v299
      %v927 = vunpack.c.l.b16 %v300
      %v928 = vunpack.c.h.b16 %v300
      %v929 = vunpack.c.l.b16 %v301
      %v930 = vunpack.c.h.b16 %v301
      %v931 = vunpack.c.l.b16 %v302
      %v932 = vunpack.c.h.b16 %v302
      %v933 = vunpack.c.l.b16 %v303
      %v934 = vunpack.c.h.b16 %v303
      %v935 = vunpack.c.l.b16 %v304
      %v936 = vunpack.c.h.b16 %v304
      %v937 = vunpack.c.l.b16 %v305
      %v938 = vunpack.c.h.b16 %v305
      %v939 = vunpack.c.l.b16 %v306
      %v940 = vunpack.c.h.b16 %v306
      %v941 = vunpack.c.l.b16 %v307
      %v942 = vunpack.c.h.b16 %v307
      %v943 = vunpack.c.l.b16 %v308
      %v944 = vunpack.c.h.b16 %v308
      %v945 = vunpack.c.l.b16 %v309
      %v946 = vunpack.c.h.b16 %v309
      %v947 = vunpack.c.l.b16 %v310
      %v948 = vunpack.c.h.b16 %v310
      %v949 = vunpack.c.l.b16 %v311
      %v950 = vunpack.c.h.b16 %v311
      %v951 = vunpack.c.l.b16 %v312
      %v952 = vunpack.c.h.b16 %v312
      %v953 = vunpack.c.l.b16 %v313
      %v954 = vunpack.c.h.b16 %v313
      %v955 = vunpack.c.l.b16 %v314
      %v956 = vunpack.c.h.b16 %v314
      %v957 = vunpack.c.l.b16 %v315
      %v958 = vunpack.c.h.b16 %v315
      %v959 = vunpack.c.l.b16 %v316
      %v960 = vunpack.c.h.b16 %v316
      %v961 = vunpack.c.l.b16 %v317
      %v962 = vunpack.c.h.b16 %v317
      %v963 = vunpack.c.l.b16 %v318
      %v964 = vunpack.c.h.b16 %v318
      %v965 = vunpack.c.l.b16 %v319
      %v966 = vunpack.c.h.b16 %v319
      %v967 = vunpack.c.l.b16 %v320
      %v968 = vunpack.c.h.b16 %v320
      %v969 = vunpack.c.l.b16 %v321
      %v970 = vunpack.c.h.b16 %v321
      %v971 = vunpack.c.l.b16 %v322
      %v972 = vunpack.c.h.b16 %v322
      %v973 = vunpack.c.l.b16 %v323
      %v974 = vunpack.c.h.b16 %v323
      %v975 = vunpack.c.l.b16 %v324
      %v976 = vunpack.c.h.b16 %v324
      %v977 = vunpack.c.l.b16 %v325
      %v978 = vunpack.c.h.b16 %v325
      %v979 = vunpack.c.l.b16 %v326
      %v980 = vunpack.c.h.b16 %v326
      %v981 = vunpack.c.l.b16 %v327
      %v982 = vunpack.c.h.b16 %v327
      %v983 = vunpack.c.l.b16 %v328
      %v984 = vunpack.c.h.b16 %v328
      %v985 = vunpack.c.l.b16 %v329
      %v986 = vunpack.c.h.b16 %v329
      %v987 = vunpack.c.l.b16 %v330
      %v988 = vunpack.c.h.b16 %v330
      %v989 = vunpack.c.l.b16 %v331
      %v990 = vunpack.c.h.b16 %v331
      %v991 = vunpack.c.l.b16 %v332
      %v992 = vunpack.c.h.b16 %v332
      %v993 = vunpack.c.l.b16 %v333
      %v994 = vunpack.c.h.b16 %v333
      %v995 = vunpack.c.l.b16 %v334
      %v996 = vunpack.c.h.b16 %v334
      %v997 = vunpack.c.l.b16 %v335
      %v998 = vunpack.c.h.b16 %v335
      %v999 = vunpack.c.l.b16 %v336
      %v1000 = vunpack.c.h.b16 %v336
      %v1001 = vunpack.c.l.b16 %v337
      %v1002 = vunpack.c.h.b16 %v337
      %v1003 = vunpack.c.l.b16 %v338
      %v1004 = vunpack.c.h.b16 %v338
      %v1005 = vunpack.c.l.b16 %v339
      %v1006 = vunpack.c.h.b16 %v339
      %v1007 = vunpack.c.l.b16 %v340
      %v1008 = vunpack.c.h.b16 %v340
      %v1009 = vunpack.c.l.b16 %v341
      %v1010 = vunpack.c.h.b16 %v341
      %v1011 = vunpack.c.l.b16 %v342
      %v1012 = vunpack.c.h.b16 %v342
      %v1013 = vunpack.c.l.b16 %v343
      %v1014 = vunpack.c.h.b16 %v343
      %v1015 = vunpack.c.l.b16 %v344
      %v1016 = vunpack.c.h.b16 %v344
      %v1017 = vunpack.c.l.b16 %v345
      %v1018 = vunpack.c.h.b16 %v345
      %v1019 = vunpack.c.l.b16 %v346
      %v1020 = vunpack.c.h.b16 %v346
      %v1021 = vunpack.c.l.b16 %v347
      %v1022 = vunpack.c.h.b16 %v347
      %v1023 = vunpack.c.l.b16 %v348
      %v1024 = vunpack.c.h.b16 %v348
      %v1025 = vunpack.c.l.b16 %v349
      %v1026 = vunpack.c.h.b16 %v349
      %v1027 = vunpack.c.l.b16 %v350
      %v1028 = vunpack.c.h.b16 %v350
      %v1029 = vunpack.c.l.b16 %v351
      %v1030 = vunpack.c.h.b16 %v351
      %v1031 = vunpack.c.l.b16 %v352
      %v1032 = vunpack.c.h.b16 %v352
      %v1033 = vunpack.c.l.b16 %v353
      %v1034 = vunpack.c.h.b16 %v353
      %v1035 = vunpack.c.l.b16 %v354
      %v1036 = vunpack.c.h.b16 %v354
      %v1037 = vunpack.c.l.b16 %v355
      %v1038 = vunpack.c.h.b16 %v355
      %v1039 = vunpack.c.l.b16 %v356
      %v1040 = vunpack.c.h.b16 %v356
      %v1041 = vunpack.c.l.b16 %v357
      %v1042 = vunpack.c.h.b16 %v357
      %v1043 = vunpack.c.l.b16 %v358
      %v1044 = vunpack.c.h.b16 %v358
      %v1045 = vunpack.c.l.b16 %v359
      %v1046 = vunpack.c.h.b16 %v359
      %v1047 = vunpack.c.l.b16 %v360
      %v1048 = vunpack.c.h.b16 %v360
      %v1049 = vunpack.c.l.b16 %v361
      %v1050 = vunpack.c.h.b16 %v361
      %v1051 = vunpack.c.l.b16 %v362
      %v1052 = vunpack.c.h.b16 %v362
      %v1053 = vunpack.c.l.b16 %v363
      %v1054 = vunpack.c.h.b16 %v363
      %v1055 = vunpack.c.l.b16 %v364
      %v1056 = vunpack.c.h.b16 %v364
      %v1057 = vunpack.c.l.b16 %v365
      %v1058 = vunpack.c.h.b16 %v365
      %v1059 = vunpack.c.l.b16 %v366
      %v1060 = vunpack.c.h.b16 %v366
      %v1061 = vunpack.c.l.b16 %v367
      %v1062 = vunpack.c.h.b16 %v367
      %v1063 = vunpack.c.l.b16 %v368
      %v1064 = vunpack.c.h.b16 %v368
      %v1065 = vunpack.c.l.b16 %v369
      %v1066 = vunpack.c.h.b16 %v369
      %v1067 = vunpack.c.l.b16 %v370
      %v1068 = vunpack.c.h.b16 %v370
      %v1069 = vunpack.c.l.b16 %v371
      %v1070 = vunpack.c.h.b16 %v371
      %v1071 = vunpack.c.l.b16 %v372
      %v1072 = vunpack.c.h.b16 %v372
      %v1073 = vunpack.c.l.b16 %v373
      %v1074 = vunpack.c.h.b16 %v373
      %v1075 = vunpack.c.l.b16 %v374
      %v1076 = vunpack.c.h.b16 %v374
      %v1077 = vunpack.c.l.b16 %v375
      %v1078 = vunpack.c.h.b16 %v375
      %v1079 = vunpack.c.l.b16 %v376
      %v1080 = vunpack.c.h.b16 %v376
      %v1081 = vunpack.c.l.b16 %v377
      %v1082 = vunpack.c.h.b16 %v377
      %v1083 = vunpack.c.l.b16 %v378
      %v1084 = vunpack.c.h.b16 %v378
      %v1085 = vunpack.c.l.b16 %v379
      %v1086 = vunpack.c.h.b16 %v379
      %v1087 = vunpack.c.l.b16 %v380
      %v1088 = vunpack.c.h.b16 %v380
      %v1089 = vunpack.c.l.b16 %v381
      %v1090 = vunpack.c.h.b16 %v381
      %v1091 = vunpack.c.l.b16 %v382
      %v1092 = vunpack.c.h.b16 %v382
      %v1093 = vunpack.c.l.b16 %v383
      %v1094 = vunpack.c.h.b16 %v383
      %v1095 = vunpack.c.l.b16 %v384
      %v1096 = vunpack.c.h.b16 %v384
      %v1097 = vunpack.c.l.b16 %v385
      %v1098 = vunpack.c.h.b16 %v385
      %v1099 = vunpack.c.l.b16 %v386
      %v1100 = vunpack.c.h.b16 %v386
      %v1101 = vunpack.c.l.b16 %v387
      %v1102 = vunpack.c.h.b16 %v387
      %v1103 = vunpack.c.l.b16 %v388
      %v1104 = vunpack.c.h.b16 %v388
      %v1105 = vunpack.c.l.b16 %v389
      %v1106 = vunpack.c.h.b16 %v389
      %v1107 = vunpack.c.l.b16 %v390
      %v1108 = vunpack.c.h.b16 %v390
      %v1109 = vunpack.c.l.b16 %v391
      %v1110 = vunpack.c.h.b16 %v391
      %v1111 = vunpack.c.l.b16 %v392
      %v1112 = vunpack.c.h.b16 %v392
      %v1113 = vunpack.c.l.b16 %v393
      %v1114 = vunpack.c.h.b16 %v393
      %v1115 = vunpack.c.l.b16 %v394
      %v1116 = vunpack.c.h.b16 %v394
      %v1117 = vunpack.c.l.b16 %v395
      %v1118 = vunpack.c.h.b16 %v395
      %v1119 = vunpack.c.l.b16 %v396
      %v1120 = vunpack.c.h.b16 %v396
      %v1121 = vunpack.c.l.b16 %v397
      %v1122 = vunpack.c.h.b16 %v397
      %v1123 = vunpack.c.l.b16 %v398
      %v1124 = vunpack.c.h.b16 %v398
      %v1125 = vunpack.c.l.b16 %v399
      %v1126 = vunpack.c.h.b16 %v399
      %v1127 = vunpack.c.l.b16 %v400
      %v1128 = vunpack.c.h.b16 %v400
      %v1129 = vunpack.c.l.b16 %v401
      %v1130 = vunpack.c.h.b16 %v401
      %v1131 = vunpack.c.l.b16 %v402
      %v1132 = vunpack.c.h.b16 %v402
      %v1133 = vunpack.c.l.b16 %v403
      %v1134 = vunpack.c.h.b16 %v403
      %v1135 = vunpack.c.l.b16 %v404
      %v1136 = vunpack.c.h.b16 %v404
      %v1137 = vunpack.c.l.b16 %v405
      %v1138 = vunpack.c.h.b16 %v405
      %v1139 = vunpack.c.l.b16 %v406
      %v1140 = vunpack.c.h.b16 %v406
      %v1141 = vunpack.c.l.b16 %v407
      %v1142 = vunpack.c.h.b16 %v407
      %v1143 = vunpack.c.l.b16 %v408
      %v1144 = vunpack.c.h.b16 %v408
      %v1145 = vunpack.c.l.b16 %v409
      %v1146 = vunpack.c.h.b16 %v409
      %v1147 = vunpack.c.l.b16 %v410
      %v1148 = vunpack.c.h.b16 %v410
      %v1149 = vunpack.c.l.b16 %v411
      %v1150 = vunpack.c.h.b16 %v411
      %v1151 = vunpack.c.l.b16 %v412
      %v1152 = vunpack.c.h.b16 %v412
      %v1153 = vunpack.c.l.b16 %v413
      %v1154 = vunpack.c.h.b16 %v413
      %v1155 = vunpack.c.l.b16 %v414
      %v1156 = vunpack.c.h.b16 %v414
      %v1157 = vunpack.c.l.b16 %v415
      %v1158 = vunpack.c.h.b16 %v415
      %v1159 = vunpack.c.l.b16 %v416
      %v1160 = vunpack.c.h.b16 %v416
      %v1161 = vunpack.c.l.b16 %v417
      %v1162 = vunpack.c.h.b16 %v417
      %v1163 = vunpack.c.l.b16 %v418
      %v1164 = vunpack.c.h.b16 %v418
      %v1165 = vunpack.c.l.b16 %v419
      %v1166 = vunpack.c.h.b16 %v419
      %v1167 = vunpack.c.l.b16 %v420
      %v1168 = vunpack.c.h.b16 %v420
      %v1169 = vunpack.c.l.b16 %v421
      %v1170 = vunpack.c.h.b16 %v421
      %v1171 = vunpack.c.l.b16 %v422
      %v1172 = vunpack.c.h.b16 %v422
      %v1173 = vunpack.c.l.b16 %v423
      %v1174 = vunpack.c.h.b16 %v423
      %v1175 = vunpack.c.l.b16 %v424
      %v1176 = vunpack.c.h.b16 %v424
      %v1177 = vunpack.c.l.b16 %v425
      %v1178 = vunpack.c.h.b16 %v425
      %v1179 = vunpack.c.l.b16 %v426
      %v1180 = vunpack.c.h.b16 %v426
      %v1181 = vunpack.c.l.b16 %v427
      %v1182 = vunpack.c.h.b16 %v427
      %v1183 = vunpack.c.l.b16 %v428
      %v1184 = vunpack.c.h.b16 %v428
      %v1185 = vunpack.c.l.b16 %v429
      %v1186 = vunpack.c.h.b16 %v429
      %v1187 = vunpack.c.l.b16 %v430
      %v1188 = vunpack.c.h.b16 %v430
      %v1189 = vunpack.c.l.b16 %v431
      %v1190 = vunpack.c.h.b16 %v431
      %v1191 = vunpack.c.l.b16 %v432
      %v1192 = vunpack.c.h.b16 %v432
      %v1193 = vunpack.c.l.b16 %v433
      %v1194 = vunpack.c.h.b16 %v433
      %v1195 = vunpack.c.l.b16 %v434
      %v1196 = vunpack.c.h.b16 %v434
      %v1197 = vunpack.c.l.b16 %v435
      %v1198 = vunpack.c.h.b16 %v435
      %v1199 = vunpack.c.l.b16 %v436
      %v1200 = vunpack.c.h.b16 %v436
      %v1201 = vunpack.c.l.b16 %v437
      %v1202 = vunpack.c.h.b16 %v437
      %v1203 = vunpack.c.l.b16 %v438
      %v1204 = vunpack.c.h.b16 %v438
      %v1205 = vunpack.c.l.b16 %v439
      %v1206 = vunpack.c.h.b16 %v439
      %v1207 = vunpack.c.l.b16 %v440
      %v1208 = vunpack.c.h.b16 %v440
      %v1209 = vunpack.c.l.b16 %v441
      %v1210 = vunpack.c.h.b16 %v441
      %v1211 = vunpack.c.l.b16 %v442
      %v1212 = vunpack.c.h.b16 %v442
      %v1213 = vunpack.c.l.b16 %v443
      %v1214 = vunpack.c.h.b16 %v443
      %v1215 = vunpack.c.l.b16 %v444
      %v1216 = vunpack.c.h.b16 %v444
      %v1217 = vunpack.c.l.b16 %v445
      %v1218 = vunpack.c.h.b16 %v445
      %v1219 = vunpack.c.l.b16 %v446
      %v1220 = vunpack.c.h.b16 %v446
      %v1221 = vunpack.c.l.b16 %v447
      %v1222 = vunpack.c.h.b16 %v447
      %v1223 = vpack.c.b16 %v727, %v711
      %v1224 = vpack.c.b16 %v728, %v712
      %v1225 = vpack.c.b16 %v729, %v713
      %v1226 = vpack.c.b16 %v730, %v714
      %v1227 = vpack.c.b16 %v731, %v715
      %v1228 = vpack.c.b16 %v732, %v716
      %v1229 = vpack.c.b16 %v733, %v717
      %v1230 = vpack.c.b16 %v734, %v718
      %v1231 = vpack.c.b16 %v735, %v719
      %v1232 = vpack.c.b16 %v736, %v720
      %v1233 = vpack.c.b16 %v737, %v721
      %v1234 = vpack.c.b16 %v738, %v722
      %v1235 = vpack.c.b16 %v739, %v723
      %v1236 = vpack.c.b16 %v740, %v724
      %v1237 = vpack.c.b16 %v741, %v725
      %v1238 = vpack.c.b16 %v742, %v726
      %v1239 = vpack.c.b16 %v759, %v743
      %v1240 = vpack.c.b16 %v760, %v744
      %v1241 = vpack.c.b16 %v761, %v745
      %v1242 = vpack.c.b16 %v762, %v746
      %v1243 = vpack.c.b16 %v763, %v747
      %v1244 = vpack.c.b16 %v764, %v748
      %v1245 = vpack.c.b16 %v765, %v749
      %v1246 = vpack.c.b16 %v766, %v750
      %v1247 = vpack.c.b16 %v767, %v751
      %v1248 = vpack.c.b16 %v768, %v752
      %v1249 = vpack.c.b16 %v769, %v753
      %v1250 = vpack.c.b16 %v770, %v754
      %v1251 = vpack.c.b16 %v771, %v755
      %v1252 = vpack.c.b16 %v772, %v756
      %v1253 = vpack.c.b16 %v773, %v757
      %v1254 = vpack.c.b16 %v774, %v758
      %v1255 = vpack.c.b16 %v791, %v775
      %v1256 = vpack.c.b16 %v792, %v776
      %v1257 = vpack.c.b16 %v793, %v777
      %v1258 = vpack.c.b16 %v794, %v778
      %v1259 = vpack.c.b16 %v795, %v779
      %v1260 = vpack.c.b16 %v796, %v780
      %v1261 = vpack.c.b16 %v797, %v781
      %v1262 = vpack.c.b16 %v798, %v782
      %v1263 = vpack.c.b16 %v799, %v783
      %v1264 = vpack.c.b16 %v800, %v784
      %v1265 = vpack.c.b16 %v801, %v785
      %v1266 = vpack.c.b16 %v802, %v786
      %v1267 = vpack.c.b16 %v803, %v787
      %v1268 = vpack.c.b16 %v804, %v788
      %v1269 = vpack.c.b16 %v805, %v789
      %v1270 = vpack.c.b16 %v806, %v790
      %v1271 = vpack.c.b16 %v823, %v807
      %v1272 = vpack.c.b16 %v824, %v808
      %v1273 = vpack.c.b16 %v825, %v809
      %v1274 = vpack.c.b16 %v826, %v810
      %v1275 = vpack.c.b16 %v827, %v811
      %v1276 = vpack.c.b16 %v828, %v812
      %v1277 = vpack.c.b16 %v829, %v813
      %v1278 = vpack.c.b16 %v830, %v814
      %v1279 = vpack.c.b16 %v831, %v815
      %v1280 = vpack.c.b16 %v832, %v816
      %v1281 = vpack.c.b16 %v833, %v817
      %v1282 = vpack.c.b16 %v834, %v818
      %v1283 = vpack.c.b16 %v835, %v819
      %v1284 = vpack.c.b16 %v836, %v820
      %v1285 = vpack.c.b16 %v837, %v821
      %v1286 = vpack.c.b16 %v838, %v822
      %v1287 = vpack.c.b16 %v855, %v839
      %v1288 = vpack.c.b16 %v856, %v840
      %v1289 = vpack.c.b16 %v857, %v841
      %v1290 = vpack.c.b16 %v858, %v842
      %v1291 = vpack.c.b16 %v859, %v843
      %v1292 = vpack.c.b16 %v860, %v844
      %v1293 = vpack.c.b16 %v861, %v845
      %v1294 = vpack.c.b16 %v862, %v846
      %v1295 = vpack.c.b16 %v863, %v847
      %v1296 = vpack.c.b16 %v864, %v848
      %v1297 = vpack.c.b16 %v865, %v849
      %v1298 = vpack.c.b16 %v866, %v850
      %v1299 = vpack.c.b16 %v867, %v851
      %v1300 = vpack.c.b16 %v868, %v852
      %v1301 = vpack.c.b16 %v869, %v853
      %v1302 = vpack.c.b16 %v870, %v854
      %v1303 = vpack.c.b16 %v887, %v871
      %v1304 = vpack.c.b16 %v888, %v872
      %v1305 = vpack.c.b16 %v889, %v873
      %v1306 = vpack.c.b16 %v890, %v874
      %v1307 = vpack.c.b16 %v891, %v875
      %v1308 = vpack.c.b16 %v892, %v876
      %v1309 = vpack.c.b16 %v893, %v877
      %v1310 = vpack.c.b16 %v894, %v878
      %v1311 = vpack.c.b16 %v895, %v879
      %v1312 = vpack.c.b16 %v896, %v880
      %v1313 = vpack.c.b16 %v897, %v881
      %v1314 = vpack.c.b16 %v898, %v882
      %v1315 = vpack.c.b16 %v899, %v883
      %v1316 = vpack.c.b16 %v900, %v884
      %v1317 = vpack.c.b16 %v901, %v885
      %v1318 = vpack.c.b16 %v902, %v886
      %v1319 = vpack.c.b16 %v919, %v903
      %v1320 = vpack.c.b16 %v920, %v904
      %v1321 = vpack.c.b16 %v921, %v905
      %v1322 = vpack.c.b16 %v922, %v906
      %v1323 = vpack.c.b16 %v923, %v907
      %v1324 = vpack.c.b16 %v924, %v908
      %v1325 = vpack.c.b16 %v925, %v909
      %v1326 = vpack.c.b16 %v926, %v910
      %v1327 = vpack.c.b16 %v927, %v911
      %v1328 = vpack.c.b16 %v928, %v912
      %v1329 = vpack.c.b16 %v929, %v913
      %v1330 = vpack.c.b16 %v930, %v914
      %v1331 = vpack.c.b16 %v931, %v915
      %v1332 = vpack.c.b16 %v932, %v916
      %v1333 = vpack.c.b16 %v933, %v917
      %v1334 = vpack.c.b16 %v934, %v918
      %v1335 = vpack.c.b16 %v951, %v935
      %v1336 = vpack.c.b16 %v952, %v936
      %v1337 = vpack.c.b16 %v953, %v937
      %v1338 = vpack.c.b16 %v954, %v938
      %v1339 = vpack.c.b16 %v955, %v939
      %v1340 = vpack.c.b16 %v956, %v940
      %v1341 = vpack.c.b16 %v957, %v941
      %v1342 = vpack.c.b16 %v958, %v942
      %v1343 = vpack.c.b16 %v959, %v943
      %v1344 = vpack.c.b16 %v960, %v944
      %v1345 = vpack.c.b16 %v961, %v945
      %v1346 = vpack.c.b16 %v962, %v946
      %v1347 = vpack.c.b16 %v963, %v947
      %v1348 = vpack.c.b16 %v964, %v948
      %v1349 = vpack.c.b16 %v965, %v949
      %v1350 = vpack.c.b16 %v966, %v950
      %v1351 = vpack.c.b16 %v983, %v967
      %v1352 = vpack.c.b16 %v984, %v968
      %v1353 = vpack.c.b16 %v985, %v969
      %v1354 = vpack.c.b16 %v986, %v970
      %v1355 = vpack.c.b16 %v987, %v971
      %v1356 = vpack.c.b16 %v988, %v972
      %v1357 = vpack.c.b16 %v989, %v973
      %v1358 = vpack.c.b16 %v990, %v974
      %v1359 = vpack.c.b16 %v991, %v975
      %v1360 = vpack.c.b16 %v992, %v976
      %v1361 = vpack.c.b16 %v993, %v977
      %v1362 = vpack.c.b16 %v994, %v978
      %v1363 = vpack.c.b16 %v995, %v979
      %v1364 = vpack.c.b16 %v996, %v980
      %v1365 = vpack.c.b16 %v997, %v981
      %v1366 = vpack.c.b16 %v998, %v982
      %v1367 = vpack.c.b16 %v1015, %v999
      %v1368 = vpack.c.b16 %v1016, %v1000
      %v1369 = vpack.c.b16 %v1017, %v1001
      %v1370 = vpack.c.b16 %v1018, %v1002
      %v1371 = vpack.c.b16 %v1019, %v1003
      %v1372 = vpack.c.b16 %v1020, %v1004
      %v1373 = vpack.c.b16 %v1021, %v1005
      %v1374 = vpack.c.b16 %v1022, %v1006
      %v1375 = vpack.c.b16 %v1023, %v1007
      %v1376 = vpack.c.b16 %v1024, %v1008
      %v1377 = vpack.c.b16 %v1025, %v1009
      %v1378 = vpack.c.b16 %v1026, %v1010
      %v1379 = vpack.c.b16 %v1027, %v1011
      %v1380 = vpack.c.b16 %v1028, %v1012
      %v1381 = vpack.c.b16 %v1029, %v1013
      %v1382 = vpack.c.b16 %v1030, %v1014
      %v1383 = vpack.c.b16 %v1047, %v1031
      %v1384 = vpack.c.b16 %v1048, %v1032
      %v1385 = vpack.c.b16 %v1049, %v1033
      %v1386 = vpack.c.b16 %v1050, %v1034
      %v1387 = vpack.c.b16 %v1051, %v1035
      %v1388 = vpack.c.b16 %v1052, %v1036
      %v1389 = vpack.c.b16 %v1053, %v1037
      %v1390 = vpack.c.b16 %v1054, %v1038
      %v1391 = vpack.c.b16 %v1055, %v1039
      %v1392 = vpack.c.b16 %v1056, %v1040
      %v1393 = vpack.c.b16 %v1057, %v1041
      %v1394 = vpack.c.b16 %v1058, %v1042
      %v1395 = vpack.c.b16 %v1059, %v1043
      %v1396 = vpack.c.b16 %v1060, %v1044
      %v1397 = vpack.c.b16 %v1061, %v1045
      %v1398 = vpack.c.b16 %v1062, %v1046
      %v1399 = vpack.c.b16 %v1079, %v1063
      %v1400 = vpack.c.b16 %v1080, %v1064
      %v1401 = vpack.c.b16 %v1081, %v1065
      %v1402 = vpack.c.b16 %v1082, %v1066
      %v1403 = vpack.c.b16 %v1083, %v1067
      %v1404 = vpack.c.b16 %v1084, %v1068
      %v1405 = vpack.c.b16 %v1085, %v1069
      %v1406 = vpack.c.b16 %v1086, %v1070
      %v1407 = vpack.c.b16 %v1087, %v1071
      %v1408 = vpack.c.b16 %v1088, %v1072
      %v1409 = vpack.c.b16 %v1089, %v1073
      %v1410 = vpack.c.b16 %v1090, %v1074
      %v1411 = vpack.c.b16 %v1091, %v1075
      %v1412 = vpack.c.b16 %v1092, %v1076
      %v1413 = vpack.c.b16 %v1093, %v1077
      %v1414 = vpack.c.b16 %v1094, %v1078
      %v1415 = vpack.c.b16 %v1111, %v1095
      %v1416 = vpack.c.b16 %v1112, %v1096
      %v1417 = vpack.c.b16 %v1113, %v1097
      %v1418 = vpack.c.b16 %v1114, %v1098
      %v1419 = vpack.c.b16 %v1115, %v1099
      %v1420 = vpack.c.b16 %v1116, %v1100
      %v1421 = vpack.c.b16 %v1117, %v1101
      %v1422 = vpack.c.b16 %v1118, %v1102
      %v1423 = vpack.c.b16 %v1119, %v1103
      %v1424 = vpack.c.b16 %v1120, %v1104
      %v1425 = vpack.c.b16 %v1121, %v1105
      %v1426 = vpack.c.b16 %v1122, %v1106
      %v1427 = vpack.c.b16 %v1123, %v1107
      %v1428 = vpack.c.b16 %v1124, %v1108
      %v1429 = vpack.c.b16 %v1125, %v1109
      %v1430 = vpack.c.b16 %v1126, %v1110
      %v1431 = vpack.c.b16 %v1143, %v1127
      %v1432 = vpack.c.b16 %v1144, %v1128
      %v1433 = vpack.c.b16 %v1145, %v1129
      %v1434 = vpack.c.b16 %v1146, %v1130
      %v1435 = vpack.c.b16 %v1147, %v1131
      %v1436 = vpack.c.b16 %v1148, %v1132
      %v1437 = vpack.c.b16 %v1149, %v1133
      %v1438 = vpack.c.b16 %v1150, %v1134
      %v1439 = vpack.c.b16 %v1151, %v1135
      %v1440 = vpack.c.b16 %v1152, %v1136
      %v1441 = vpack.c.b16 %v1153, %v1137
      %v1442 = vpack.c.b16 %v1154, %v1138
      %v1443 = vpack.c.b16 %v1155, %v1139
      %v1444 = vpack.c.b16 %v1156, %v1140
      %v1445 = vpack.c.b16 %v1157, %v1141
      %v1446 = vpack.c.b16 %v1158, %v1142
      %v1447 = vpack.c.b16 %v1175, %v1159
      %v1448 = vpack.c.b16 %v1176, %v1160
      %v1449 = vpack.c.b16 %v1177, %v1161
      %v1450 = vpack.c.b16 %v1178, %v1162
      %v1451 = vpack.c.b16 %v1179, %v1163
      %v1452 = vpack.c.b16 %v1180, %v1164
      %v1453 = vpack.c.b16 %v1181, %v1165
      %v1454 = vpack.c.b16 %v1182, %v1166
      %v1455 = vpack.c.b16 %v1183, %v1167
      %v1456 = vpack.c.b16 %v1184, %v1168
      %v1457 = vpack.c.b16 %v1185, %v1169
      %v1458 = vpack.c.b16 %v1186, %v1170
      %v1459 = vpack.c.b16 %v1187, %v1171
      %v1460 = vpack.c.b16 %v1188, %v1172
      %v1461 = vpack.c.b16 %v1189, %v1173
      %v1462 = vpack.c.b16 %v1190, %v1174
      %v1463 = vpack.c.b16 %v1207, %v1191
      %v1464 = vpack.c.b16 %v1208, %v1192
      %v1465 = vpack.c.b16 %v1209, %v1193
      %v1466 = vpack.c.b16 %v1210, %v1194
      %v1467 = vpack.c.b16 %v1211, %v1195
      %v1468 = vpack.c.b16 %v1212, %v1196
      %v1469 = vpack.c.b16 %v1213, %v1197
      %v1470 = vpack.c.b16 %v1214, %v1198
      %v1471 = vpack.c.b16 %v1215, %v1199
      %v1472 = vpack.c.b16 %v1216, %v1200
      %v1473 = vpack.c.b16 %v1217, %v1201
      %v1474 = vpack.c.b16 %v1218, %v1202
      %v1475 = vpack.c.b16 %v1219, %v1203
      %v1476 = vpack.c.b16 %v1220, %v1204
      %v1477 = vpack.c.b16 %v1221, %v1205
      %v1478 = vpack.c.b16 %v1222, %v1206
      %1735 = vmatprep.subr.bf16.mxu0 %v1224
      %1736 = vmatpush1.bf16.msra.mxu0 %v1223
      %1737 = vmatprep.subr.bf16.mxu0 %v1240
      %1738 = vmatpush1.bf16.msra.mxu0 %v1239
      %1739 = vmatprep.subr.bf16.mxu0 %v1256
      %1740 = vmatpush1.bf16.msra.mxu0 %v1255
      %1741 = vmatprep.subr.bf16.mxu0 %v1272
      %1742 = vmatpush1.bf16.msra.mxu0 %v1271
      %1743 = vmatprep.subr.bf16.mxu0 %v1288
      %1744 = vmatpush1.bf16.msra.mxu0 %v1287
      %1745 = vmatprep.subr.bf16.mxu0 %v1304
      %1746 = vmatpush1.bf16.msra.mxu0 %v1303
      %1747 = vmatprep.subr.bf16.mxu0 %v1320
      %1748 = vmatpush1.bf16.msra.mxu0 %v1319
      %1749 = vmatprep.subr.bf16.mxu0 %v1336
      %1750 = vmatpush1.bf16.msra.mxu0 %v1335
      %1751 = vmatprep.subr.bf16.mxu0 %v1352
      %1752 = vmatpush1.bf16.msra.mxu0 %v1351
      %1753 = vmatprep.subr.bf16.mxu0 %v1368
      %1754 = vmatpush1.bf16.msra.mxu0 %v1367
      %1755 = vmatprep.subr.bf16.mxu0 %v1384
      %1756 = vmatpush1.bf16.msra.mxu0 %v1383
      %1757 = vmatprep.subr.bf16.mxu0 %v1400
      %1758 = vmatpush1.bf16.msra.mxu0 %v1399
      %1759 = vmatprep.subr.bf16.mxu0 %v1416
      %1760 = vmatpush1.bf16.msra.mxu0 %v1415
      %1761 = vmatprep.subr.bf16.mxu0 %v1432
      %1762 = vmatpush1.bf16.msra.mxu0 %v1431
      %1763 = vmatprep.subr.bf16.mxu0 %v1448
      %1764 = vmatpush1.bf16.msra.mxu0 %v1447
      %1765 = vmatprep.subr.bf16.mxu0 %v1464
      %1766 = vmatpush1.bf16.msra.mxu0 %v1463
      %1767 = vmatprep.mubr.bf16.mxu0 %v452
      %1768 = vmatmul.mubr.bf16.gmra.mrb[0].mxu0 %v451
      %v1769 = vpop.f32.mrb[0].mxu0
      %v1770 = vadd.f32 0.0, %v1769
      %v1771 = vpop.f32.mrb[0].mxu0
      %v1772 = vadd.f32 0.0, %v1771
      %v1773 = vpop.f32.mrb[0].mxu0
      %v1774 = vpop.f32.mrb[0].mxu0
      %1775 = vdwg.mxu0
      %1776 = vmatprep.subr.bf16.mxu0 %v1226
      %1777 = vmatpush1.bf16.msra.mxu0 %v1225
      %1778 = vmatprep.subr.bf16.mxu0 %v1242
      %1779 = vmatpush1.bf16.msra.mxu0 %v1241
      %1780 = vmatprep.subr.bf16.mxu0 %v1258
      %1781 = vmatpush1.bf16.msra.mxu0 %v1257
      %1782 = vmatprep.subr.bf16.mxu0 %v1274
      %1783 = vmatpush1.bf16.msra.mxu0 %v1273
      %1784 = vmatprep.subr.bf16.mxu0 %v1290
      %1785 = vmatpush1.bf16.msra.mxu0 %v1289
      %1786 = vmatprep.subr.bf16.mxu0 %v1306
      %1787 = vmatpush1.bf16.msra.mxu0 %v1305
      %1788 = vmatprep.subr.bf16.mxu0 %v1322
      %1789 = vmatpush1.bf16.msra.mxu0 %v1321
      %1790 = vmatprep.subr.bf16.mxu0 %v1338
      %1791 = vmatpush1.bf16.msra.mxu0 %v1337
      %1792 = vmatprep.subr.bf16.mxu0 %v1354
      %1793 = vmatpush1.bf16.msra.mxu0 %v1353
      %1794 = vmatprep.subr.bf16.mxu0 %v1370
      %1795 = vmatpush1.bf16.msra.mxu0 %v1369
      %1796 = vmatprep.subr.bf16.mxu0 %v1386
      %1797 = vmatpush1.bf16.msra.mxu0 %v1385
      %1798 = vmatprep.subr.bf16.mxu0 %v1402
      %1799 = vmatpush1.bf16.msra.mxu0 %v1401
      %1800 = vmatprep.subr.bf16.mxu0 %v1418
      %1801 = vmatpush1.bf16.msra.mxu0 %v1417
      %1802 = vmatprep.subr.bf16.mxu0 %v1434
      %1803 = vmatpush1.bf16.msra.mxu0 %v1433
      %1804 = vmatprep.subr.bf16.mxu0 %v1450
      %1805 = vmatpush1.bf16.msra.mxu0 %v1449
      %1806 = vmatprep.subr.bf16.mxu0 %v1466
      %1807 = vmatpush1.bf16.msra.mxu0 %v1465
      %1808 = vmatprep.mubr.bf16.mxu0 %v452
      %1809 = vmatmul.mubr.bf16.gmra.mrb[0].mxu0 %v451
      %v1810 = vpop.f32.mrb[0].mxu0
      %v1811 = vadd.f32 0.0, %v1810
      %v1812 = vpop.f32.mrb[0].mxu0
      %v1813 = vadd.f32 0.0, %v1812
      %v1814 = vpop.f32.mrb[0].mxu0
      %v1815 = vpop.f32.mrb[0].mxu0
      %1816 = vdwg.mxu0
      %1817 = vmatprep.subr.bf16.mxu0 %v1228
      %1818 = vmatpush1.bf16.msra.mxu0 %v1227
      %1819 = vmatprep.subr.bf16.mxu0 %v1244
      %1820 = vmatpush1.bf16.msra.mxu0 %v1243
      %1821 = vmatprep.subr.bf16.mxu0 %v1260
      %1822 = vmatpush1.bf16.msra.mxu0 %v1259
      %1823 = vmatprep.subr.bf16.mxu0 %v1276
      %1824 = vmatpush1.bf16.msra.mxu0 %v1275
      %1825 = vmatprep.subr.bf16.mxu0 %v1292
      %1826 = vmatpush1.bf16.msra.mxu0 %v1291
      %1827 = vmatprep.subr.bf16.mxu0 %v1308
      %1828 = vmatpush1.bf16.msra.mxu0 %v1307
      %1829 = vmatprep.subr.bf16.mxu0 %v1324
      %1830 = vmatpush1.bf16.msra.mxu0 %v1323
      %1831 = vmatprep.subr.bf16.mxu0 %v1340
      %1832 = vmatpush1.bf16.msra.mxu0 %v1339
      %1833 = vmatprep.subr.bf16.mxu0 %v1356
      %1834 = vmatpush1.bf16.msra.mxu0 %v1355
      %1835 = vmatprep.subr.bf16.mxu0 %v1372
      %1836 = vmatpush1.bf16.msra.mxu0 %v1371
      %1837 = vmatprep.subr.bf16.mxu0 %v1388
      %1838 = vmatpush1.bf16.msra.mxu0 %v1387
      %1839 = vmatprep.subr.bf16.mxu0 %v1404
      %1840 = vmatpush1.bf16.msra.mxu0 %v1403
      %1841 = vmatprep.subr.bf16.mxu0 %v1420
      %1842 = vmatpush1.bf16.msra.mxu0 %v1419
      %1843 = vmatprep.subr.bf16.mxu0 %v1436
      %1844 = vmatpush1.bf16.msra.mxu0 %v1435
      %1845 = vmatprep.subr.bf16.mxu0 %v1452
      %1846 = vmatpush1.bf16.msra.mxu0 %v1451
      %1847 = vmatprep.subr.bf16.mxu0 %v1468
      %1848 = vmatpush1.bf16.msra.mxu0 %v1467
      %1849 = vmatprep.mubr.bf16.mxu0 %v452
      %1850 = vmatmul.mubr.bf16.gmra.mrb[0].mxu0 %v451
      %v1851 = vpop.f32.mrb[0].mxu0
      %v1852 = vadd.f32 0.0, %v1851
      %v1853 = vpop.f32.mrb[0].mxu0
      %v1854 = vadd.f32 0.0, %v1853
      %v1855 = vpop.f32.mrb[0].mxu0
      %v1856 = vpop.f32.mrb[0].mxu0
      %1857 = vdwg.mxu0
      %1858 = vmatprep.subr.bf16.mxu0 %v1230
      %1859 = vmatpush1.bf16.msra.mxu0 %v1229
      %1860 = vmatprep.subr.bf16.mxu0 %v1246
      %1861 = vmatpush1.bf16.msra.mxu0 %v1245
      %1862 = vmatprep.subr.bf16.mxu0 %v1262
      %1863 = vmatpush1.bf16.msra.mxu0 %v1261
      %1864 = vmatprep.subr.bf16.mxu0 %v1278
      %1865 = vmatpush1.bf16.msra.mxu0 %v1277
      %1866 = vmatprep.subr.bf16.mxu0 %v1294
      %1867 = vmatpush1.bf16.msra.mxu0 %v1293
      %1868 = vmatprep.subr.bf16.mxu0 %v1310
      %1869 = vmatpush1.bf16.msra.mxu0 %v1309
      %1870 = vmatprep.subr.bf16.mxu0 %v1326
      %1871 = vmatpush1.bf16.msra.mxu0 %v1325
      %1872 = vmatprep.subr.bf16.mxu0 %v1342
      %1873 = vmatpush1.bf16.msra.mxu0 %v1341
      %1874 = vmatprep.subr.bf16.mxu0 %v1358
      %1875 = vmatpush1.bf16.msra.mxu0 %v1357
      %1876 = vmatprep.subr.bf16.mxu0 %v1374
      %1877 = vmatpush1.bf16.msra.mxu0 %v1373
      %1878 = vmatprep.subr.bf16.mxu0 %v1390
      %1879 = vmatpush1.bf16.msra.mxu0 %v1389
      %1880 = vmatprep.subr.bf16.mxu0 %v1406
      %1881 = vmatpush1.bf16.msra.mxu0 %v1405
      %1882 = vmatprep.subr.bf16.mxu0 %v1422
      %1883 = vmatpush1.bf16.msra.mxu0 %v1421
      %1884 = vmatprep.subr.bf16.mxu0 %v1438
      %1885 = vmatpush1.bf16.msra.mxu0 %v1437
      %1886 = vmatprep.subr.bf16.mxu0 %v1454
      %1887 = vmatpush1.bf16.msra.mxu0 %v1453
      %1888 = vmatprep.subr.bf16.mxu0 %v1470
      %1889 = vmatpush1.bf16.msra.mxu0 %v1469
      %1890 = vmatprep.mubr.bf16.mxu0 %v452
      %1891 = vmatmul.mubr.bf16.gmra.mrb[0].mxu0 %v451
      %v1892 = vpop.f32.mrb[0].mxu0
      %v1893 = vadd.f32 0.0, %v1892
      %v1894 = vpop.f32.mrb[0].mxu0
      %v1895 = vadd.f32 0.0, %v1894
      %v1896 = vpop.f32.mrb[0].mxu0
      %v1897 = vpop.f32.mrb[0].mxu0
      %1898 = vdwg.mxu0
      %1899 = vmatprep.subr.bf16.mxu0 %v1232
      %1900 = vmatpush1.bf16.msra.mxu0 %v1231
      %1901 = vmatprep.subr.bf16.mxu0 %v1248
      %1902 = vmatpush1.bf16.msra.mxu0 %v1247
      %1903 = vmatprep.subr.bf16.mxu0 %v1264
      %1904 = vmatpush1.bf16.msra.mxu0 %v1263
      %1905 = vmatprep.subr.bf16.mxu0 %v1280
      %1906 = vmatpush1.bf16.msra.mxu0 %v1279
      %1907 = vmatprep.subr.bf16.mxu0 %v1296
      %1908 = vmatpush1.bf16.msra.mxu0 %v1295
      %1909 = vmatprep.subr.bf16.mxu0 %v1312
      %1910 = vmatpush1.bf16.msra.mxu0 %v1311
      %1911 = vmatprep.subr.bf16.mxu0 %v1328
      %1912 = vmatpush1.bf16.msra.mxu0 %v1327
      %1913 = vmatprep.subr.bf16.mxu0 %v1344
      %1914 = vmatpush1.bf16.msra.mxu0 %v1343
      %1915 = vmatprep.subr.bf16.mxu0 %v1360
      %1916 = vmatpush1.bf16.msra.mxu0 %v1359
      %1917 = vmatprep.subr.bf16.mxu0 %v1376
      %1918 = vmatpush1.bf16.msra.mxu0 %v1375
      %1919 = vmatprep.subr.bf16.mxu0 %v1392
      %1920 = vmatpush1.bf16.msra.mxu0 %v1391
      %1921 = vmatprep.subr.bf16.mxu0 %v1408
      %1922 = vmatpush1.bf16.msra.mxu0 %v1407
      %1923 = vmatprep.subr.bf16.mxu0 %v1424
      %1924 = vmatpush1.bf16.msra.mxu0 %v1423
      %1925 = vmatprep.subr.bf16.mxu0 %v1440
      %1926 = vmatpush1.bf16.msra.mxu0 %v1439
      %1927 = vmatprep.subr.bf16.mxu0 %v1456
      %1928 = vmatpush1.bf16.msra.mxu0 %v1455
      %1929 = vmatprep.subr.bf16.mxu0 %v1472
      %1930 = vmatpush1.bf16.msra.mxu0 %v1471
      %1931 = vmatprep.mubr.bf16.mxu0 %v452
      %1932 = vmatmul.mubr.bf16.gmra.mrb[0].mxu0 %v451
      %v1933 = vpop.f32.mrb[0].mxu0
      %v1934 = vadd.f32 0.0, %v1933
      %v1935 = vpop.f32.mrb[0].mxu0
      %v1936 = vadd.f32 0.0, %v1935
      %v1937 = vpop.f32.mrb[0].mxu0
      %v1938 = vpop.f32.mrb[0].mxu0
      %1939 = vdwg.mxu0
      %1940 = vmatprep.subr.bf16.mxu0 %v1234
      %1941 = vmatpush1.bf16.msra.mxu0 %v1233
      %1942 = vmatprep.subr.bf16.mxu0 %v1250
      %1943 = vmatpush1.bf16.msra.mxu0 %v1249
      %1944 = vmatprep.subr.bf16.mxu0 %v1266
      %1945 = vmatpush1.bf16.msra.mxu0 %v1265
      %1946 = vmatprep.subr.bf16.mxu0 %v1282
      %1947 = vmatpush1.bf16.msra.mxu0 %v1281
      %1948 = vmatprep.subr.bf16.mxu0 %v1298
      %1949 = vmatpush1.bf16.msra.mxu0 %v1297
      %1950 = vmatprep.subr.bf16.mxu0 %v1314
      %1951 = vmatpush1.bf16.msra.mxu0 %v1313
      %1952 = vmatprep.subr.bf16.mxu0 %v1330
      %1953 = vmatpush1.bf16.msra.mxu0 %v1329
      %1954 = vmatprep.subr.bf16.mxu0 %v1346
      %1955 = vmatpush1.bf16.msra.mxu0 %v1345
      %1956 = vmatprep.subr.bf16.mxu0 %v1362
      %1957 = vmatpush1.bf16.msra.mxu0 %v1361
      %1958 = vmatprep.subr.bf16.mxu0 %v1378
      %1959 = vmatpush1.bf16.msra.mxu0 %v1377
      %1960 = vmatprep.subr.bf16.mxu0 %v1394
      %1961 = vmatpush1.bf16.msra.mxu0 %v1393
      %1962 = vmatprep.subr.bf16.mxu0 %v1410
      %1963 = vmatpush1.bf16.msra.mxu0 %v1409
      %1964 = vmatprep.subr.bf16.mxu0 %v1426
      %1965 = vmatpush1.bf16.msra.mxu0 %v1425
      %1966 = vmatprep.subr.bf16.mxu0 %v1442
      %1967 = vmatpush1.bf16.msra.mxu0 %v1441
      %1968 = vmatprep.subr.bf16.mxu0 %v1458
      %1969 = vmatpush1.bf16.msra.mxu0 %v1457
      %1970 = vmatprep.subr.bf16.mxu0 %v1474
      %1971 = vmatpush1.bf16.msra.mxu0 %v1473
      %1972 = vmatprep.mubr.bf16.mxu0 %v452
      %1973 = vmatmul.mubr.bf16.gmra.mrb[0].mxu0 %v451
      %v1974 = vpop.f32.mrb[0].mxu0
      %v1975 = vadd.f32 0.0, %v1974
      %v1976 = vpop.f32.mrb[0].mxu0
      %v1977 = vadd.f32 0.0, %v1976
      %v1978 = vpop.f32.mrb[0].mxu0
      %v1979 = vpop.f32.mrb[0].mxu0
      %1980 = vdwg.mxu0
      %1981 = vmatprep.subr.bf16.mxu0 %v1236
      %1982 = vmatpush1.bf16.msra.mxu0 %v1235
      %1983 = vmatprep.subr.bf16.mxu0 %v1252
      %1984 = vmatpush1.bf16.msra.mxu0 %v1251
      %1985 = vmatprep.subr.bf16.mxu0 %v1268
      %1986 = vmatpush1.bf16.msra.mxu0 %v1267
      %1987 = vmatprep.subr.bf16.mxu0 %v1284
      %1988 = vmatpush1.bf16.msra.mxu0 %v1283
      %1989 = vmatprep.subr.bf16.mxu0 %v1300
      %1990 = vmatpush1.bf16.msra.mxu0 %v1299
      %1991 = vmatprep.subr.bf16.mxu0 %v1316
      %1992 = vmatpush1.bf16.msra.mxu0 %v1315
      %1993 = vmatprep.subr.bf16.mxu0 %v1332
      %1994 = vmatpush1.bf16.msra.mxu0 %v1331
      %1995 = vmatprep.subr.bf16.mxu0 %v1348
      %1996 = vmatpush1.bf16.msra.mxu0 %v1347
      %1997 = vmatprep.subr.bf16.mxu0 %v1364
      %1998 = vmatpush1.bf16.msra.mxu0 %v1363
      %1999 = vmatprep.subr.bf16.mxu0 %v1380
      %2000 = vmatpush1.bf16.msra.mxu0 %v1379
      %2001 = vmatprep.subr.bf16.mxu0 %v1396
      %2002 = vmatpush1.bf16.msra.mxu0 %v1395
      %2003 = vmatprep.subr.bf16.mxu0 %v1412
      %2004 = vmatpush1.bf16.msra.mxu0 %v1411
      %2005 = vmatprep.subr.bf16.mxu0 %v1428
      %2006 = vmatpush1.bf16.msra.mxu0 %v1427
      %2007 = vmatprep.subr.bf16.mxu0 %v1444
      %2008 = vmatpush1.bf16.msra.mxu0 %v1443
      %2009 = vmatprep.subr.bf16.mxu0 %v1460
      %2010 = vmatpush1.bf16.msra.mxu0 %v1459
      %2011 = vmatprep.subr.bf16.mxu0 %v1476
      %2012 = vmatpush1.bf16.msra.mxu0 %v1475
      %2013 = vmatprep.mubr.bf16.mxu0 %v452
      %2014 = vmatmul.mubr.bf16.gmra.mrb[0].mxu0 %v451
      %v2015 = vpop.f32.mrb[0].mxu0
      %v2016 = vadd.f32 0.0, %v2015
      %v2017 = vpop.f32.mrb[0].mxu0
      %v2018 = vadd.f32 0.0, %v2017
      %v2019 = vpop.f32.mrb[0].mxu0
      %v2020 = vpop.f32.mrb[0].mxu0
      %2021 = vdwg.mxu0
      %2022 = vmatprep.subr.bf16.mxu0 %v1238
      %2023 = vmatpush1.bf16.msra.mxu0 %v1237
      %2024 = vmatprep.subr.bf16.mxu0 %v1254
      %2025 = vmatpush1.bf16.msra.mxu0 %v1253
      %2026 = vmatprep.subr.bf16.mxu0 %v1270
      %2027 = vmatpush1.bf16.msra.mxu0 %v1269
      %2028 = vmatprep.subr.bf16.mxu0 %v1286
      %2029 = vmatpush1.bf16.msra.mxu0 %v1285
      %2030 = vmatprep.subr.bf16.mxu0 %v1302
      %2031 = vmatpush1.bf16.msra.mxu0 %v1301
      %2032 = vmatprep.subr.bf16.mxu0 %v1318
      %2033 = vmatpush1.bf16.msra.mxu0 %v1317
      %2034 = vmatprep.subr.bf16.mxu0 %v1334
      %2035 = vmatpush1.bf16.msra.mxu0 %v1333
      %2036 = vmatprep.subr.bf16.mxu0 %v1350
      %2037 = vmatpush1.bf16.msra.mxu0 %v1349
      %2038 = vmatprep.subr.bf16.mxu0 %v1366
      %2039 = vmatpush1.bf16.msra.mxu0 %v1365
      %2040 = vmatprep.subr.bf16.mxu0 %v1382
      %2041 = vmatpush1.bf16.msra.mxu0 %v1381
      %2042 = vmatprep.subr.bf16.mxu0 %v1398
      %2043 = vmatpush1.bf16.msra.mxu0 %v1397
      %2044 = vmatprep.subr.bf16.mxu0 %v1414
      %2045 = vmatpush1.bf16.msra.mxu0 %v1413
      %2046 = vmatprep.subr.bf16.mxu0 %v1430
      %2047 = vmatpush1.bf16.msra.mxu0 %v1429
      %2048 = vmatprep.subr.bf16.mxu0 %v1446
      %2049 = vmatpush1.bf16.msra.mxu0 %v1445
      %2050 = vmatprep.subr.bf16.mxu0 %v1462
      %2051 = vmatpush1.bf16.msra.mxu0 %v1461
      %2052 = vmatprep.subr.bf16.mxu0 %v1478
      %2053 = vmatpush1.bf16.msra.mxu0 %v1477
      %2054 = vmatprep.mubr.bf16.mxu0 %v452
      %2055 = vmatmul.mubr.bf16.gmra.mrb[0].mxu0 %v451
      %v2056 = vpop.f32.mrb[0].mxu0
      %v2057 = vadd.f32 0.0, %v2056
      %v2058 = vpop.f32.mrb[0].mxu0
      %v2059 = vadd.f32 0.0, %v2058
      %v2060 = vpop.f32.mrb[0].mxu0
      %v2061 = vpop.f32.mrb[0].mxu0
      %2062 = vdwg.mxu0
      %v2063 = vadd.f32 %v1770, %v1772
      %v2064 = vadd.f32 %v2063, %v1811
      %v2065 = vadd.f32 %v2064, %v1813
      %v2066 = vadd.f32 %v2065, %v1852
      %v2067 = vadd.f32 %v2066, %v1854
      %v2068 = vadd.f32 %v2067, %v1893
      %v2069 = vadd.f32 %v2068, %v1895
      %v2070 = vadd.f32 %v2069, %v1934
      %v2071 = vadd.f32 %v2070, %v1936
      %v2072 = vadd.f32 %v2071, %v1975
      %v2073 = vadd.f32 %v2072, %v1977
      %v2074 = vadd.f32 %v2073, %v2016
      %v2075 = vadd.f32 %v2074, %v2018
      %v2076 = vadd.f32 %v2075, %v2057
      %v2077 = vadd.f32 %v2076, %v2059
      %2078 = vadd.xlane.f32.xlu0 %v2077
      %v2079 = vpop.xlane.xlu0 %2078
      %v2080 = vmul.f32 %v2079, 0.00048828125
      %v2081 = vsub.f32 %v1770, %v2080
      %v2082 = vsub.f32 %v1772, %v2080
      %v2083 = vsub.f32 %v1811, %v2080
      %v2084 = vsub.f32 %v1813, %v2080
      %v2085 = vsub.f32 %v1852, %v2080
      %v2086 = vsub.f32 %v1854, %v2080
      %v2087 = vsub.f32 %v1893, %v2080
      %v2088 = vsub.f32 %v1895, %v2080
      %v2089 = vsub.f32 %v1934, %v2080
      %v2090 = vsub.f32 %v1936, %v2080
      %v2091 = vsub.f32 %v1975, %v2080
      %v2092 = vsub.f32 %v1977, %v2080
      %v2093 = vsub.f32 %v2016, %v2080
      %v2094 = vsub.f32 %v2018, %v2080
      %v2095 = vsub.f32 %v2057, %v2080
      %v2096 = vsub.f32 %v2059, %v2080
      %v2097 = vmul.f32 %v2081, %v2081
      %v2098 = vmul.f32 %v2082, %v2082
      %v2099 = vmul.f32 %v2083, %v2083
      %v2100 = vmul.f32 %v2084, %v2084
      %v2101 = vmul.f32 %v2085, %v2085
      %v2102 = vmul.f32 %v2086, %v2086
      %v2103 = vmul.f32 %v2087, %v2087
      %v2104 = vmul.f32 %v2088, %v2088
      %v2105 = vmul.f32 %v2089, %v2089
      %v2106 = vmul.f32 %v2090, %v2090
      %v2107 = vmul.f32 %v2091, %v2091
      %v2108 = vmul.f32 %v2092, %v2092
      %v2109 = vmul.f32 %v2093, %v2093
      %v2110 = vmul.f32 %v2094, %v2094
      %v2111 = vmul.f32 %v2095, %v2095
      %v2112 = vmul.f32 %v2096, %v2096
      %v2113 = vadd.f32 %v2097, %v2098
      %v2114 = vadd.f32 %v2113, %v2099
      %v2115 = vadd.f32 %v2114, %v2100
      %v2116 = vadd.f32 %v2115, %v2101
      %v2117 = vadd.f32 %v2116, %v2102
      %v2118 = vadd.f32 %v2117, %v2103
      %v2119 = vadd.f32 %v2118, %v2104
      %v2120 = vadd.f32 %v2119, %v2105
      %v2121 = vadd.f32 %v2120, %v2106
      %v2122 = vadd.f32 %v2121, %v2107
      %v2123 = vadd.f32 %v2122, %v2108
      %v2124 = vadd.f32 %v2123, %v2109
      %v2125 = vadd.f32 %v2124, %v2110
      %v2126 = vadd.f32 %v2125, %v2111
      %v2127 = vadd.f32 %v2126, %v2112
      %2128 = vadd.xlane.f32.xlu0 %v2127
      %v2129 = vpop.xlane.xlu0 %2128
      %v2130 = vmul.f32 %v2080, %v2080
      %v2131 = vmul.f32 %v2130, 0.0
      %v2132 = vsub.f32 %v2129, %v2131
      %v2133 = vmul.f32 %v2132, 0.00048828125
      %v2134 = vmax.f32 %v2133, 0.0
      %v2135 = vadd.f32 %v2134, 1e-05
      %v2136 = vrsqrt.pop %v2135
      %v2137 = vmul.f32 %v2081, %v2136
      %v2138 = vmul.f32 %v2082, %v2136
      %v2139 = vmul.f32 %v2083, %v2136
      %v2140 = vmul.f32 %v2084, %v2136
      %v2141 = vmul.f32 %v2085, %v2136
      %v2142 = vmul.f32 %v2086, %v2136
      %v2143 = vmul.f32 %v2087, %v2136
      %v2144 = vmul.f32 %v2088, %v2136
      %v2145 = vmul.f32 %v2089, %v2136
      %v2146 = vmul.f32 %v2090, %v2136
      %v2147 = vmul.f32 %v2091, %v2136
      %v2148 = vmul.f32 %v2092, %v2136
      %v2149 = vmul.f32 %v2093, %v2136
      %v2150 = vmul.f32 %v2094, %v2136
      %v2151 = vmul.f32 %v2095, %v2136
      %v2152 = vmul.f32 %v2096, %v2136
      %vm2153 = vcmp.ge.f32.partialorder %v2137, 0.0
      %vm2154 = vcmp.ge.f32.partialorder %v2138, 0.0
      %vm2155 = vcmp.ge.f32.partialorder %v2139, 0.0
      %vm2156 = vcmp.ge.f32.partialorder %v2140, 0.0
      %vm2157 = vcmp.ge.f32.partialorder %v2141, 0.0
      %vm2158 = vcmp.ge.f32.partialorder %v2142, 0.0
      %vm2159 = vcmp.ge.f32.partialorder %v2143, 0.0
      %vm2160 = vcmp.ge.f32.partialorder %v2144, 0.0
      %vm2161 = vcmp.ge.f32.partialorder %v2145, 0.0
      %vm2162 = vcmp.ge.f32.partialorder %v2146, 0.0
      %vm2163 = vcmp.ge.f32.partialorder %v2147, 0.0
      %vm2164 = vcmp.ge.f32.partialorder %v2148, 0.0
      %vm2165 = vcmp.ge.f32.partialorder %v2149, 0.0
      %vm2166 = vcmp.ge.f32.partialorder %v2150, 0.0
      %vm2167 = vcmp.ge.f32.partialorder %v2151, 0.0
      %vm2168 = vcmp.ge.f32.partialorder %v2152, 0.0
      %v2169 = vmul.f32 %v2137, 0.01
      %v2170 = vmul.f32 %v2138, 0.01
      %v2171 = vmul.f32 %v2139, 0.01
      %v2172 = vmul.f32 %v2140, 0.01
      %v2173 = vmul.f32 %v2141, 0.01
      %v2174 = vmul.f32 %v2142, 0.01
      %v2175 = vmul.f32 %v2143, 0.01
      %v2176 = vmul.f32 %v2144, 0.01
      %v2177 = vmul.f32 %v2145, 0.01
      %v2178 = vmul.f32 %v2146, 0.01
      %v2179 = vmul.f32 %v2147, 0.01
      %v2180 = vmul.f32 %v2148, 0.01
      %v2181 = vmul.f32 %v2149, 0.01
      %v2182 = vmul.f32 %v2150, 0.01
      %v2183 = vmul.f32 %v2151, 0.01
      %v2184 = vmul.f32 %v2152, 0.01
      %v2185 = vsel %vm2153, %v2137, %v2169
      %v2186 = vsel %vm2154, %v2138, %v2170
      %v2187 = vsel %vm2155, %v2139, %v2171
      %v2188 = vsel %vm2156, %v2140, %v2172
      %v2189 = vsel %vm2157, %v2141, %v2173
      %v2190 = vsel %vm2158, %v2142, %v2174
      %v2191 = vsel %vm2159, %v2143, %v2175
      %v2192 = vsel %vm2160, %v2144, %v2176
      %v2193 = vsel %vm2161, %v2145, %v2177
      %v2194 = vsel %vm2162, %v2146, %v2178
      %v2195 = vsel %vm2163, %v2147, %v2179
      %v2196 = vsel %vm2164, %v2148, %v2180
      %v2197 = vsel %vm2165, %v2149, %v2181
      %v2198 = vsel %vm2166, %v2150, %v2182
      %v2199 = vsel %vm2167, %v2151, %v2183
      %v2200 = vsel %vm2168, %v2152, %v2184
      %v2201 = vld [vmem:[%s185] sm:$0xff]
      %v2202 = vld [vmem:[%s185 + $0x8] sm:$0xff]
      %v2203 = vld [vmem:[%s185 + $0x10] sm:$0xff]
      %v2204 = vld [vmem:[%s185 + $0x18] sm:$0xff]
      %v2205 = vld [vmem:[%s185 + $0x20] sm:$0xff]
      %v2206 = vld [vmem:[%s185 + $0x28] sm:$0xff]
      %v2207 = vld [vmem:[%s185 + $0x30] sm:$0xff]
      %v2208 = vld [vmem:[%s185 + $0x38] sm:$0xff]
      %v2209 = vld [vmem:[%s185 + $0x40] sm:$0xff]
      %v2210 = vld [vmem:[%s185 + $0x48] sm:$0xff]
      %v2211 = vld [vmem:[%s185 + $0x50] sm:$0xff]
      %v2212 = vld [vmem:[%s185 + $0x58] sm:$0xff]
      %v2213 = vld [vmem:[%s185 + $0x60] sm:$0xff]
      %v2214 = vld [vmem:[%s185 + $0x68] sm:$0xff]
      %v2215 = vld [vmem:[%s185 + $0x70] sm:$0xff]
      %v2216 = vld [vmem:[%s185 + $0x78] sm:$0xff]
      %v2217 = vadd.f32 %v2185, %v2201
      %v2218 = vadd.f32 %v2186, %v2202
      %v2219 = vadd.f32 %v2187, %v2203
      %v2220 = vadd.f32 %v2188, %v2204
      %v2221 = vadd.f32 %v2189, %v2205
      %v2222 = vadd.f32 %v2190, %v2206
      %v2223 = vadd.f32 %v2191, %v2207
      %v2224 = vadd.f32 %v2192, %v2208
      %v2225 = vadd.f32 %v2193, %v2209
      %v2226 = vadd.f32 %v2194, %v2210
      %v2227 = vadd.f32 %v2195, %v2211
      %v2228 = vadd.f32 %v2196, %v2212
      %v2229 = vadd.f32 %v2197, %v2213
      %v2230 = vadd.f32 %v2198, %v2214
      %v2231 = vadd.f32 %v2199, %v2215
      %v2232 = vadd.f32 %v2200, %v2216
      %2233 = vst [vmem:[%s190] sm:$0xff] %v2217
      %2234 = vst [vmem:[%s190 + $0x8] sm:$0xff] %v2218
      %2235 = vst [vmem:[%s190 + $0x10] sm:$0xff] %v2219
      %2236 = vst [vmem:[%s190 + $0x18] sm:$0xff] %v2220
      %2237 = vst [vmem:[%s190 + $0x20] sm:$0xff] %v2221
      %2238 = vst [vmem:[%s190 + $0x28] sm:$0xff] %v2222
      %2239 = vst [vmem:[%s190 + $0x30] sm:$0xff] %v2223
      %2240 = vst [vmem:[%s190 + $0x38] sm:$0xff] %v2224
      %2241 = vst [vmem:[%s190 + $0x40] sm:$0xff] %v2225
      %2242 = vst [vmem:[%s190 + $0x48] sm:$0xff] %v2226
      %2243 = vst [vmem:[%s190 + $0x50] sm:$0xff] %v2227
      %2244 = vst [vmem:[%s190 + $0x58] sm:$0xff] %v2228
      %2245 = vst [vmem:[%s190 + $0x60] sm:$0xff] %v2229
      %2246 = vst [vmem:[%s190 + $0x68] sm:$0xff] %v2230
      %2247 = vst [vmem:[%s190 + $0x70] sm:$0xff] %v2231
      %2248 = vst [vmem:[%s190 + $0x78] sm:$0xff] %v2232
      %p2249 = scmp.lt.s32.totalorder %s14, 1
      %s2250 = scalar_select %p2249, %s14, 1
      %s2251 = smul.addr %s2250, 16
      %s2252 = smul.addr %s2251, 8
      %s2253 = scalar_lea.vmem %s3, %s2252
      // Predicated region
      $region33: #{downblock_forward.2} parent=31 // pred_check
        %p2254 = pneg %p105
      $region34: #{downblock_forward.2} parent=31 // pred_check_branch
        %2256 = sbr.rel (%p2254) target = $region36
      $region35: #{downblock_forward.2} parent=31 // pred_region
        _
      $region36: #{downblock_forward.2} parent=31 // pred_fallthru
        _
    $region32: #{downblock_forward.2} parent=5 // pred_fallthru
      _
    %p2257 = scmp.le.s32.totalorder 2, %s9
    // Predicated region
    $region37: #{downblock_forward.2} parent=5 // pred_check
      %p2258 = pneg %p2257
    $region38: #{downblock_forward.2} parent=5 // pred_check_branch
      %2260 = sbr.rel (%p2258) target = $region40
    $region39: #{downblock_forward.2} parent=5 // pred_region
      %s2261 = ssub.s32 %s9, 2
      // Predicated region
      $region41: #{downblock_forward.2} parent=39 // pred_check
        %p2262 = pneg %p111
      $region42: #{downblock_forward.2} parent=39 // pred_check_branch
        %2264 = sbr.rel (%p2262) target = $region44
      $region43: #{downblock_forward.2} parent=39 // pred_region
        %p2265 = scmp.lt.s32.totalorder %s15, 1
        %s2266 = scalar_select %p2265, %s15, 1
        %s2267 = smul.addr %s2266, 16
        %s2268 = smul.addr %s2267, 8
        %s2269 = scalar_lea.vmem %s3, %s2268
      $region44: #{downblock_forward.2} parent=39 // pred_fallthru
        _
    $region40: #{downblock_forward.2} parent=5 // pred_fallthru
      _
  $region6: #{downblock_forward.2} parent=0 // loop_footer
    %s13 = sadd.s32 1, %s9
  $region7: #{downblock_forward.2} parent=0 // loop_footer_branch
    %8 = sbr.rel target = $region3
  $region8: #{downblock_forward.2} parent=0 // loop_exit
    _

// kernel: downblock_forward.3
$region0: #{downblock_forward.3}
  #allocation0 [shape = 'u32[]', space=smem, size = 0x4, offset = 0x4, fixed_abs, tag = 'smem constant byte address 0x4 - core index']
  #allocation1 [shape = 'u32[144,128]{1,0:T(1,128)}', space=vmem, size = 0x12000, scoped, tag = 'internal scratch']
  %s0 = inlined_call_operand.vmem [shape: bf16[2,256,256], index: 0, kind: input, shape index: {}]
  %s1 = inlined_call_operand.vmem [shape: bf16[16,256], index: 1, kind: input, shape index: {}]
  %s2 = inlined_call_operand.vmem [shape: f32[2,16,256], index: 2, kind: output, shape index: {}]
  %s3 = sld [smem:[#allocation0]]
  $region41: #{downblock_forward.3} parent=0
    _
  %s5 = ssub.s32 1, %s3
  %s6 = scalar_select 0, %s5, %s3
  loop: start=0, step=1, limit=4
  $region2: #{downblock_forward.3} parent=0 // loop_pre_header
    _
  $region3: #{downblock_forward.3} parent=0 // loop_header
    %s8 = sphi 0, %s12
    %p9 = scmp.ge.s32.totalorder %s8, 4
    %s18 = sphi 0, %s20
    %s21 = sphi 0, %s18
    %s22 = sphi 0, %s21
    %s38 = sphi 0, %s22
    %s42 = sphi 0, %s42
    %s44 = sphi 0, %s42
    %s45 = sphi 0, %s44
    %s59 = sphi 0, %s45
    %s65 = sphi 0, %s67
    %s68 = sphi 0, %s65
    %s69 = sphi 0, %s68
    %s85 = sphi 0, %s69
  $region4: #{downblock_forward.3} parent=0 // loop_header_branch
    %11 = sbr.rel (%p9) target = $region8
  $region5: #{downblock_forward.3} parent=0 // loop_body
    %s13 = ssub.s32 %s8, 1
    %s14 = ssub.s32 %s8, 2
    %s15 = sadd.s32 %s8, 1
    %s16 = ssub.s32 %s8, %s15
    %p17 = scmp.eq.s32.totalorder %s16, 0
    %s19 = sadd.s32 %s18, 1
    %s20 = scalar_select %p17, %s18, %s19
    %p23 = pneg %p17
    %p24 = scmp.eq.s32.totalorder %s8, 1
    %p25 = por %p23, %p24
    %p26 = scmp.ne.s32.totalorder %s18, %s21
    %p27 = scmp.eq.s32.totalorder %s8, 0
    %p28 = por %p26, %p27
    %p29 = scmp.ne.s32.totalorder %s18, %s21
    %p30 = scmp.eq.s32.totalorder %s13, 1
    %p31 = por %p29, %p30
    %p32 = scmp.ne.s32.totalorder %s21, %s22
    %p33 = scmp.eq.s32.totalorder %s13, 0
    %p34 = por %p32, %p33
    %p35 = scmp.ne.s32.totalorder %s21, %s22
    %p36 = scmp.eq.s32.totalorder %s14, 1
    %p37 = por %p35, %p36
    %p39 = scmp.ne.s32.totalorder %s22, %s38
    %p40 = scmp.eq.s32.totalorder %s14, 0
    %p41 = por %p39, %p40
    %s43 = sadd.s32 %s42, 1
    %p46 = scmp.eq.s32.totalorder %s8, 1
    %p47 = scmp.ne.s32.totalorder %s42, %s44
    %p48 = scmp.eq.s32.totalorder %s8, 0
    %p49 = por %p47, %p48
    %p50 = scmp.ne.s32.totalorder %s42, %s44
    %p51 = scmp.eq.s32.totalorder %s13, 1
    %p52 = por %p50, %p51
    %p53 = scmp.ne.s32.totalorder %s44, %s45
    %p54 = scmp.eq.s32.totalorder %s13, 0
    %p55 = por %p53, %p54
    %p56 = scmp.ne.s32.totalorder %s44, %s45
    %p57 = scmp.eq.s32.totalorder %s14, 1
    %p58 = por %p56, %p57
    %p60 = scmp.ne.s32.totalorder %s45, %s59
    %p61 = scmp.eq.s32.totalorder %s14, 0
    %p62 = por %p60, %p61
    %s63 = ssub.s32 %s8, %s15
    %p64 = scmp.eq.s32.totalorder %s63, 0
    %s66 = sadd.s32 %s65, 1
    %s67 = scalar_select %p64, %s65, %s66
    %p70 = pneg %p64
    %p71 = scmp.eq.s32.totalorder %s8, 1
    %p72 = por %p70, %p71
    %p73 = scmp.ne.s32.totalorder %s65, %s68
    %p74 = scmp.eq.s32.totalorder %s8, 0
    %p75 = por %p73, %p74
    %p76 = scmp.ne.s32.totalorder %s65, %s68
    %p77 = scmp.eq.s32.totalorder %s13, 1
    %p78 = por %p76, %p77
    %p79 = scmp.ne.s32.totalorder %s68, %s69
    %p80 = scmp.eq.s32.totalorder %s13, 0
    %p81 = por %p79, %p80
    %p82 = scmp.ne.s32.totalorder %s68, %s69
    %p83 = scmp.eq.s32.totalorder %s14, 1
    %p84 = por %p82, %p83
    %p86 = scmp.ne.s32.totalorder %s69, %s85
    %p87 = scmp.eq.s32.totalorder %s14, 0
    %p88 = por %p86, %p87
    %p89 = scmp.le.s32.totalorder 1, %s8
    %p90 = scmp.lt.s32.totalorder %s8, 3
    %p91 = pnand %p89, %p90
    %p92 = pneg %p91
    // Predicated region
    $region9: #{downblock_forward.3} parent=5 // pred_check
      _
    $region10: #{downblock_forward.3} parent=5 // pred_check_branch
      %94 = sbr.rel (%p91) target = $region12
    $region11: #{downblock_forward.3} parent=5 // pred_region
      %s95 = ssub.s32 %s8, 1
      // Predicated region
      $region13: #{downblock_forward.3} parent=11 // pred_check
        %p96 = pneg %p55
      $region14: #{downblock_forward.3} parent=11 // pred_check_branch
        %98 = sbr.rel (%p96) target = $region16
      $region15: #{downblock_forward.3} parent=11 // pred_region
        _
      $region16: #{downblock_forward.3} parent=11 // pred_fallthru
        _
    $region12: #{downblock_forward.3} parent=5 // pred_fallthru
      _
    %p99 = scmp.lt.s32.totalorder %s8, 2
    // Predicated region
    $region17: #{downblock_forward.3} parent=5 // pred_check
      %p100 = pneg %p99
    $region18: #{downblock_forward.3} parent=5 // pred_check_branch
      %102 = sbr.rel (%p100) target = $region20
    $region19: #{downblock_forward.3} parent=5 // pred_region
      // Predicated region
      $region21: #{downblock_forward.3} parent=19 // pred_check
        %p103 = pneg %p28
      $region22: #{downblock_forward.3} parent=19 // pred_check_branch
        %105 = sbr.rel (%p103) target = $region24
      $region23: #{downblock_forward.3} parent=19 // pred_region
        %p106 = scmp.lt.s32.totalorder %s8, 1
        %s107 = scalar_select %p106, %s8, 1
        %s108 = smul.addr %s107, 64
        %s109 = smul.addr %s108, 4
        %s110 = scalar_lea.vmem %s0, %s109
      $region24: #{downblock_forward.3} parent=19 // pred_fallthru
        _
    $region20: #{downblock_forward.3} parent=5 // pred_fallthru
      _
    %p111 = scmp.le.s32.totalorder 1, %s8
    %p112 = scmp.lt.s32.totalorder %s8, 3
    %p113 = pnand %p111, %p112
    %p114 = pneg %p113
    // Predicated region
    $region25: #{downblock_forward.3} parent=5 // pred_check
      _
    $region26: #{downblock_forward.3} parent=5 // pred_check_branch
      %116 = sbr.rel (%p113) target = $region28
    $region27: #{downblock_forward.3} parent=5 // pred_region
      %s117 = ssub.s32 %s8, 1
      %p118 = scmp.lt.s32.totalorder %s13, 1
      %s119 = scalar_select %p118, %s13, 1
      %s120 = smul.addr %s119, 64
      %s121 = smul.addr %s120, 4
      %s122 = scalar_lea.vmem %s0, %s121
      %p123 = pneg %p34
      %p124 = pneg %p31
      %p125 = pneg %p55
      %p126 = pneg %p52
      %p127 = pneg %p81
      %p128 = pneg %p78
      %p129 = scmp.lt.s32.totalorder %s13, 1
      %s130 = scalar_select %p129, %s13, 1
      %s131 = smul.addr %s130, 4
      %s132 = smul.addr %s131, 8
      %s133 = scalar_lea.vmem %s2, %s132
      %p134 = scmp.lt.s32.totalorder %s13, 1
      %s135 = scalar_select %p134, %s13, 1
      %s136 = smul.addr %s135, 64
      %s137 = smul.addr %s136, 4
      %s138 = scalar_lea.vmem %s0, %s137
      %p139 = scmp.lt.s32.totalorder %s13, 1
      %s140 = scalar_select %p139, %s13, 1
      %s141 = smul.addr %s140, 4
      %s142 = smul.addr %s141, 8
      %s143 = scalar_lea.vmem %s2, %s142
      %v144 = vld [vmem:[%s1] sm:$0xff]
      %v145 = vld [vmem:[%s1 + $0x8] sm:$0xff]
      %v146 = vld [vmem:[%s138] sm:$0xff]
      %v147 = vld [vmem:[%s138 + $0x8] sm:$0xff]
      %v148 = vld [vmem:[%s138 + $0x10] sm:$0xff]
      %v149 = vld [vmem:[%s138 + $0x18] sm:$0xff]
      %v150 = vld [vmem:[%s138 + $0x20] sm:$0xff]
      %v151 = vld [vmem:[%s138 + $0x28] sm:$0xff]
      %v152 = vld [vmem:[%s138 + $0x30] sm:$0xff]
      %v153 = vld [vmem:[%s138 + $0x38] sm:$0xff]
      %v154 = vld [vmem:[%s138 + $0x40] sm:$0xff]
      %v155 = vld [vmem:[%s138 + $0x48] sm:$0xff]
      %v156 = vld [vmem:[%s138 + $0x50] sm:$0xff]
      %v157 = vld [vmem:[%s138 + $0x58] sm:$0xff]
      %v158 = vld [vmem:[%s138 + $0x60] sm:$0xff]
      %v159 = vld [vmem:[%s138 + $0x68] sm:$0xff]
      %v160 = vld [vmem:[%s138 + $0x70] sm:$0xff]
      %v161 = vld [vmem:[%s138 + $0x78] sm:$0xff]
      %v162 = vld [vmem:[%s138 + $0x80] sm:$0xff]
      %v163 = vld [vmem:[%s138 + $0x88] sm:$0xff]
      %v164 = vld [vmem:[%s138 + $0x90] sm:$0xff]
      %v165 = vld [vmem:[%s138 + $0x98] sm:$0xff]
      %v166 = vld [vmem:[%s138 + $0xa0] sm:$0xff]
      %v167 = vld [vmem:[%s138 + $0xa8] sm:$0xff]
      %v168 = vld [vmem:[%s138 + $0xb0] sm:$0xff]
      %v169 = vld [vmem:[%s138 + $0xb8] sm:$0xff]
      %v170 = vld [vmem:[%s138 + $0xc0] sm:$0xff]
      %v171 = vld [vmem:[%s138 + $0xc8] sm:$0xff]
      %v172 = vld [vmem:[%s138 + $0xd0] sm:$0xff]
      %v173 = vld [vmem:[%s138 + $0xd8] sm:$0xff]
      %v174 = vld [vmem:[%s138 + $0xe0] sm:$0xff]
      %v175 = vld [vmem:[%s138 + $0xe8] sm:$0xff]
      %v176 = vld [vmem:[%s138 + $0xf0] sm:$0xff]
      %v177 = vld [vmem:[%s138 + $0xf8] sm:$0xff]
      %v180 = vunpack.c.l.b16 %v144
      %v181 = vunpack.c.h.b16 %v144
      %v182 = vunpack.c.l.b16 %v145
      %v183 = vunpack.c.h.b16 %v145
      %v184 = vpack.c.b16 %v182, %v180
      %v185 = vpack.c.b16 %v183, %v181
      %v220 = vunpack.c.l.b16 %v146
      %v221 = vunpack.c.h.b16 %v146
      %v222 = vunpack.c.l.b16 %v147
      %v223 = vunpack.c.h.b16 %v147
      %v224 = vunpack.c.l.b16 %v148
      %v225 = vunpack.c.h.b16 %v148
      %v226 = vunpack.c.l.b16 %v149
      %v227 = vunpack.c.h.b16 %v149
      %v228 = vunpack.c.l.b16 %v150
      %v229 = vunpack.c.h.b16 %v150
      %v230 = vunpack.c.l.b16 %v151
      %v231 = vunpack.c.h.b16 %v151
      %v232 = vunpack.c.l.b16 %v152
      %v233 = vunpack.c.h.b16 %v152
      %v234 = vunpack.c.l.b16 %v153
      %v235 = vunpack.c.h.b16 %v153
      %v236 = vunpack.c.l.b16 %v154
      %v237 = vunpack.c.h.b16 %v154
      %v238 = vunpack.c.l.b16 %v155
      %v239 = vunpack.c.h.b16 %v155
      %v240 = vunpack.c.l.b16 %v156
      %v241 = vunpack.c.h.b16 %v156
      %v242 = vunpack.c.l.b16 %v157
      %v243 = vunpack.c.h.b16 %v157
      %v244 = vunpack.c.l.b16 %v158
      %v245 = vunpack.c.h.b16 %v158
      %v246 = vunpack.c.l.b16 %v159
      %v247 = vunpack.c.h.b16 %v159
      %v248 = vunpack.c.l.b16 %v160
      %v249 = vunpack.c.h.b16 %v160
      %v250 = vunpack.c.l.b16 %v161
      %v251 = vunpack.c.h.b16 %v161
      %v252 = vunpack.c.l.b16 %v162
      %v253 = vunpack.c.h.b16 %v162
      %v254 = vunpack.c.l.b16 %v163
      %v255 = vunpack.c.h.b16 %v163
      %v256 = vunpack.c.l.b16 %v164
      %v257 = vunpack.c.h.b16 %v164
      %v258 = vunpack.c.l.b16 %v165
      %v259 = vunpack.c.h.b16 %v165
      %v260 = vunpack.c.l.b16 %v166
      %v261 = vunpack.c.h.b16 %v166
      %v262 = vunpack.c.l.b16 %v167
      %v263 = vunpack.c.h.b16 %v167
      %v264 = vunpack.c.l.b16 %v168
      %v265 = vunpack.c.h.b16 %v168
      %v266 = vunpack.c.l.b16 %v169
      %v267 = vunpack.c.h.b16 %v169
      %v268 = vunpack.c.l.b16 %v170
      %v269 = vunpack.c.h.b16 %v170
      %v270 = vunpack.c.l.b16 %v171
      %v271 = vunpack.c.h.b16 %v171
      %v272 = vunpack.c.l.b16 %v172
      %v273 = vunpack.c.h.b16 %v172
      %v274 = vunpack.c.l.b16 %v173
      %v275 = vunpack.c.h.b16 %v173
      %v276 = vunpack.c.l.b16 %v174
      %v277 = vunpack.c.h.b16 %v174
      %v278 = vunpack.c.l.b16 %v175
      %v279 = vunpack.c.h.b16 %v175
      %v280 = vunpack.c.l.b16 %v176
      %v281 = vunpack.c.h.b16 %v176
      %v282 = vunpack.c.l.b16 %v177
      %v283 = vunpack.c.h.b16 %v177
      %v284 = vpack.c.b16 %v222, %v220
      %v285 = vpack.c.b16 %v223, %v221
      %v286 = vpack.c.b16 %v226, %v224
      %v287 = vpack.c.b16 %v227, %v225
      %v288 = vpack.c.b16 %v230, %v228
      %v289 = vpack.c.b16 %v231, %v229
      %v290 = vpack.c.b16 %v234, %v232
      %v291 = vpack.c.b16 %v235, %v233
      %v292 = vpack.c.b16 %v238, %v236
      %v293 = vpack.c.b16 %v239, %v237
      %v294 = vpack.c.b16 %v242, %v240
      %v295 = vpack.c.b16 %v243, %v241
      %v296 = vpack.c.b16 %v246, %v244
      %v297 = vpack.c.b16 %v247, %v245
      %v298 = vpack.c.b16 %v250, %v248
      %v299 = vpack.c.b16 %v251, %v249
      %v300 = vpack.c.b16 %v254, %v252
      %v301 = vpack.c.b16 %v255, %v253
      %v302 = vpack.c.b16 %v258, %v256
      %v303 = vpack.c.b16 %v259, %v257
      %v304 = vpack.c.b16 %v262, %v260
      %v305 = vpack.c.b16 %v263, %v261
      %v306 = vpack.c.b16 %v266, %v264
      %v307 = vpack.c.b16 %v267, %v265
      %v308 = vpack.c.b16 %v270, %v268
      %v309 = vpack.c.b16 %v271, %v269
      %v310 = vpack.c.b16 %v274, %v272
      %v311 = vpack.c.b16 %v275, %v273
      %v312 = vpack.c.b16 %v278, %v276
      %v313 = vpack.c.b16 %v279, %v277
      %v314 = vpack.c.b16 %v282, %v280
      %v315 = vpack.c.b16 %v283, %v281
      %348 = vmatprep.subr.bf16.mxu0 %v285
      %349 = vmatpush1.bf16.msra.mxu0 %v284
      %350 = vmatprep.subr.bf16.mxu0 %v287
      %351 = vmatpush1.bf16.msra.mxu0 %v286
      %352 = vmatprep.subr.bf16.mxu0 %v289
      %353 = vmatpush1.bf16.msra.mxu0 %v288
      %354 = vmatprep.subr.bf16.mxu0 %v291
      %355 = vmatpush1.bf16.msra.mxu0 %v290
      %356 = vmatprep.subr.bf16.mxu0 %v293
      %357 = vmatpush1.bf16.msra.mxu0 %v292
      %358 = vmatprep.subr.bf16.mxu0 %v295
      %359 = vmatpush1.bf16.msra.mxu0 %v294
      %360 = vmatprep.subr.bf16.mxu0 %v297
      %361 = vmatpush1.bf16.msra.mxu0 %v296
      %362 = vmatprep.subr.bf16.mxu0 %v299
      %363 = vmatpush1.bf16.msra.mxu0 %v298
      %364 = vmatprep.subr.bf16.mxu0 %v301
      %365 = vmatpush1.bf16.msra.mxu0 %v300
      %366 = vmatprep.subr.bf16.mxu0 %v303
      %367 = vmatpush1.bf16.msra.mxu0 %v302
      %368 = vmatprep.subr.bf16.mxu0 %v305
      %369 = vmatpush1.bf16.msra.mxu0 %v304
      %370 = vmatprep.subr.bf16.mxu0 %v307
      %371 = vmatpush1.bf16.msra.mxu0 %v306
      %372 = vmatprep.subr.bf16.mxu0 %v309
      %373 = vmatpush1.bf16.msra.mxu0 %v308
      %374 = vmatprep.subr.bf16.mxu0 %v311
      %375 = vmatpush1.bf16.msra.mxu0 %v310
      %376 = vmatprep.subr.bf16.mxu0 %v313
      %377 = vmatpush1.bf16.msra.mxu0 %v312
      %378 = vmatprep.subr.bf16.mxu0 %v315
      %379 = vmatpush1.bf16.msra.mxu0 %v314
      %380 = vmatprep.mubr.bf16.mxu0 %v185
      %381 = vmatmul.mubr.bf16.gmra.mrb[0].mxu0 %v184
      %v382 = vpop.f32.mrb[0].mxu0
      %v383 = vadd.f32 0.0, %v382
      %v384 = vpop.f32.mrb[0].mxu0
      %v385 = vadd.f32 0.0, %v384
      %v386 = vpop.f32.mrb[0].mxu0
      %v387 = vadd.f32 0.0, %v386
      %v388 = vpop.f32.mrb[0].mxu0
      %v389 = vadd.f32 0.0, %v388
      %390 = vdwg.mxu0
      %v391 = vadd.f32 %v383, %v385
      %392 = vadd.xlane.f32.xlu0 %v391
      %v393 = vpop.xlane.xlu0 %392
      %v394 = vadd.f32 %v387, %v389
      %395 = vadd.xlane.f32.xlu0 %v394
      %v396 = vpop.xlane.xlu0 %395
      %v397 = vmul.f32 %v393, 0.006802721
      %v398 = vmul.f32 %v396, 0.006802721
      %v399 = vsub.f32 %v383, %v397
      %v400 = vsub.f32 %v385, %v397
      %v401 = vsub.f32 %v387, %v398
      %v402 = vsub.f32 %v389, %v398
      %v403 = vmul.f32 %v399, %v399
      %v404 = vmul.f32 %v400, %v400
      %v405 = vmul.f32 %v401, %v401
      %v406 = vmul.f32 %v402, %v402
      %v407 = vadd.f32 %v403, %v404
      %408 = vadd.xlane.f32.xlu0 %v407
      %v409 = vpop.xlane.xlu0 %408
      %v410 = vadd.f32 %v405, %v406
      %411 = vadd.xlane.f32.xlu0 %v410
      %v412 = vpop.xlane.xlu0 %411
      %v413 = vmul.f32 %v397, %v397
      %v414 = vmul.f32 %v398, %v398
      %v415 = vmul.f32 %v413, 109.0
      %v416 = vmul.f32 %v414, 109.0
      %v417 = vsub.f32 %v409, %v415
      %v418 = vsub.f32 %v412, %v416
      %v419 = vmul.f32 %v417, 0.006802721
      %v420 = vmul.f32 %v418, 0.006802721
      %v421 = vmax.f32 %v419, 0.0
      %v422 = vmax.f32 %v420, 0.0
      %v423 = vadd.f32 %v421, 1e-05
      %v424 = vadd.f32 %v422, 1e-05
      %v425 = vrsqrt.pop %v423
      %v426 = vrsqrt.pop %v424
      %v427 = vmul.f32 %v399, %v425
      %v428 = vmul.f32 %v400, %v425
      %v429 = vmul.f32 %v401, %v426
      %v430 = vmul.f32 %v402, %v426
      %vm431 = vcmp.ge.f32.partialorder %v427, 0.0
      %vm432 = vcmp.ge.f32.partialorder %v428, 0.0
      %vm433 = vcmp.ge.f32.partialorder %v429, 0.0
      %vm434 = vcmp.ge.f32.partialorder %v430, 0.0
      %v435 = vmul.f32 %v427, 0.01
      %v436 = vmul.f32 %v428, 0.01
      %v437 = vmul.f32 %v429, 0.01
      %v438 = vmul.f32 %v430, 0.01
      %v439 = vsel %vm431, %v427, %v435
      %v440 = vsel %vm432, %v428, %v436
      %v441 = vsel %vm433, %v429, %v437
      %v442 = vsel %vm434, %v430, %v438
      %443 = vst [vmem:[%s143] sm:$0xff] %v439
      %444 = vst [vmem:[%s143 + $0x8] sm:$0xff] %v440
      %445 = vst [vmem:[%s143 + $0x10] sm:$0xff] %v441
      %446 = vst [vmem:[%s143 + $0x18] sm:$0xff] %v442
      %p447 = scmp.lt.s32.totalorder %s13, 1
      %s448 = scalar_select %p447, %s13, 1
      %s449 = smul.addr %s448, 4
      %s450 = smul.addr %s449, 8
      %s451 = scalar_lea.vmem %s2, %s450
      // Predicated region
      $region29: #{downblock_forward.3} parent=27 // pred_check
        %p452 = pneg %p78
      $region30: #{downblock_forward.3} parent=27 // pred_check_branch
        %454 = sbr.rel (%p452) target = $region32
      $region31: #{downblock_forward.3} parent=27 // pred_region
        _
      $region32: #{downblock_forward.3} parent=27 // pred_fallthru
        _
    $region28: #{downblock_forward.3} parent=5 // pred_fallthru
      _
    %p455 = scmp.le.s32.totalorder 2, %s8
    // Predicated region
    $region33: #{downblock_forward.3} parent=5 // pred_check
      %p456 = pneg %p455
    $region34: #{downblock_forward.3} parent=5 // pred_check_branch
      %458 = sbr.rel (%p456) target = $region36
    $region35: #{downblock_forward.3} parent=5 // pred_region
      %s459 = ssub.s32 %s8, 2
      // Predicated region
      $region37: #{downblock_forward.3} parent=35 // pred_check
        %p460 = pneg %p84
      $region38: #{downblock_forward.3} parent=35 // pred_check_branch
        %462 = sbr.rel (%p460) target = $region40
      $region39: #{downblock_forward.3} parent=35 // pred_region
        %p463 = scmp.lt.s32.totalorder %s14, 1
        %s464 = scalar_select %p463, %s14, 1
        %s465 = smul.addr %s464, 4
        %s466 = smul.addr %s465, 8
        %s467 = scalar_lea.vmem %s2, %s466
      $region40: #{downblock_forward.3} parent=35 // pred_fallthru
        _
    $region36: #{downblock_forward.3} parent=5 // pred_fallthru
      _
  $region6: #{downblock_forward.3} parent=0 // loop_footer
    %s12 = sadd.s32 1, %s8
  $region7: #{downblock_forward.3} parent=0 // loop_footer_branch
    %7 = sbr.rel target = $region3
  $region8: #{downblock_forward.3} parent=0 // loop_exit
    _

</llo_original>
